<compile_context>
chip_gen: v6e
topology: v6e:2x2x1
jax: 0.10.0
libtpu: 0.0.40
codegen_flags: <defaults>
</compile_context>

<pallas_src>
import math
from functools import partial

import jax
import jax.numpy as jnp
from jax import lax
from jax.experimental import pallas as pl
from jax.experimental.pallas import tpu as pltpu

LN_EPS = 1e-5                      # PyTorch nn.LayerNorm default
VMEM_LIMIT_BYTES = 32 * 1024 * 1024  # safe on v5e/v6e (128 MiB) and v7x (64 MiB)
ROW_TILE_TARGET = 1024             # amortizes ~0.35us/grid-step overhead


def _pick_row_tile(n, target=ROW_TILE_TARGET):
    """Largest multiple of 8 <= target that divides n, else the full extent."""
    t = min(target, n)
    t -= t % 8
    while t >= 8:
        if n % t == 0:
            return t
        t -= 8
    return n


# ----------------------------- Pallas kernels ------------------------------

def _patch_embed_kernel(x_ref, w_ref, b_ref, g_ref, be_ref, o_ref):
    # x_ref: (TN, K) bf16 flattened patches, w_ref: (K, D) bf16,
    # b/g/be: (1, D) f32.  Fused conv-as-matmul + bias + LayerNorm(D).
    y = jnp.dot(x_ref[...], w_ref[...], preferred_element_type=jnp.float32)
    y = y + b_ref[...]
    mu = jnp.mean(y, axis=-1, keepdims=True)
    ms = jnp.mean(y * y, axis=-1, keepdims=True)          # one-pass moments
    var = jnp.maximum(ms - mu * mu, 0.0)
    yn = (y - mu) * lax.rsqrt(var + LN_EPS)
    o_ref[...] = (yn * g_ref[...] + be_ref[...]).astype(o_ref.dtype)


def _patch_merge_kernel(x_ref, g_ref, b_ref, w_ref, o_ref):
    # x_ref: (TN, 4C) bf16 merged patches, g/b: (1, 4C) f32, w_ref: (4C, 2C) bf16.
    # Fused LayerNorm(4C) + bias-free Linear(4C -> 2C).
    x = x_ref[...].astype(jnp.float32)
    mu = jnp.mean(x, axis=-1, keepdims=True)
    ms = jnp.mean(x * x, axis=-1, keepdims=True)           # one-pass moments
    var = jnp.maximum(ms - mu * mu, 0.0)
    xn = (x - mu) * lax.rsqrt(var + LN_EPS)
    y = (xn * g_ref[...] + b_ref[...]).astype(jnp.bfloat16)
    o_ref[...] = jnp.dot(y, w_ref[...],
                         preferred_element_type=jnp.float32).astype(o_ref.dtype)


# ------------------------------ JAX wrappers --------------------------------

def patch_embed(x_nchw, w_conv, b_conv, ln_g, ln_b, patch_size):
    """PatchEmbed2D: Conv2d(k=p, stride=p) -> permute NHWC -> LayerNorm."""
    B, C, H, W = x_nchw.shape
    p = patch_size
    D = w_conv.shape[0]
    Hp, Wp = H // p, W // p
    # Patch extraction in bf16 (halves the materialized (N, K) HBM round trip).
    # Flatten (c, kh, kw) to match the Conv2d weight layout (D, C, p, p).
    xb = x_nchw.astype(jnp.bfloat16)
    xp = xb.reshape(B, C, Hp, p, Wp, p)
    xp = jnp.transpose(xp, (0, 2, 4, 1, 3, 5)).reshape(B * Hp * Wp, C * p * p)
    wk = w_conv.reshape(D, C * p * p).T.astype(jnp.bfloat16)   # (K, D)
    N, K = B * Hp * Wp, C * p * p
    TN = _pick_row_tile(N)

    cost = pl.CostEstimate(
        flops=2 * N * K * D + 8 * N * D,
        transcendentals=N,
        bytes_accessed=N * K * 2 + K * D * 2 + N * D * 2 + 3 * D * 4)

    out = pl.pallas_call(
        _patch_embed_kernel,
        out_shape=jax.ShapeDtypeStruct((N, D), jnp.bfloat16),
        grid=(N // TN,),
        in_specs=[
            pl.BlockSpec((TN, K), lambda i: (i, 0)),
            pl.BlockSpec((K, D), lambda i: (0, 0)),
            pl.BlockSpec((1, D), lambda i: (0, 0)),
            pl.BlockSpec((1, D), lambda i: (0, 0)),
            pl.BlockSpec((1, D), lambda i: (0, 0)),
        ],
        out_specs=pl.BlockSpec((TN, D), lambda i: (i, 0)),
        compiler_params=pltpu.CompilerParams(
            dimension_semantics=("parallel",),
            vmem_limit_bytes=VMEM_LIMIT_BYTES),
        cost_estimate=cost,
    )(xp, wk,
      b_conv.reshape(1, D).astype(jnp.float32),
      ln_g.reshape(1, D).astype(jnp.float32),
      ln_b.reshape(1, D).astype(jnp.float32))
    return out.reshape(B, Hp, Wp, D)


def patch_merging(x_nhwc, ln_g, ln_b, w_red):
    """PatchMerging2D: 2x2 gather -> LayerNorm(4C) -> Linear(4C, 2C, bias=False)."""
    B, H, W, C = x_nhwc.shape
    H2, W2 = H // 2, W // 2
    # Single reshape+transpose replaces the 4 strided slices + concat.
    # Channel order (dj, di, c) == torch.cat([x0, x1, x2, x3], -1) order, so
    # the reduction weight needs NO permutation.  Odd H/W is cropped like the
    # reference SHAPE_FIX path.
    xb = x_nhwc.astype(jnp.bfloat16)[:, :2 * H2, :2 * W2, :]
    xc = xb.reshape(B, H2, 2, W2, 2, C)                   # (b, i, di, j, dj, c)
    xc = jnp.transpose(xc, (0, 1, 3, 4, 2, 5))            # (b, i, j, dj, di, c)
    N, K, D = B * H2 * W2, 4 * C, 2 * C
    xf = xc.reshape(N, K)
    wk = w_red.T.astype(jnp.bfloat16)                     # (4C, 2C)
    TN = _pick_row_tile(N)

    cost = pl.CostEstimate(
        flops=2 * N * K * D + 8 * N * K,
        transcendentals=N,
        bytes_accessed=N * K * 2 + K * D * 2 + N * D * 2 + 2 * K * 4)

    out = pl.pallas_call(
        _patch_merge_kernel,
        out_shape=jax.ShapeDtypeStruct((N, D), jnp.bfloat16),
        grid=(N // TN,),
        in_specs=[
            pl.BlockSpec((TN, K), lambda i: (i, 0)),
            pl.BlockSpec((1, K), lambda i: (0, 0)),
            pl.BlockSpec((1, K), lambda i: (0, 0)),
            pl.BlockSpec((K, D), lambda i: (0, 0)),
        ],
        out_specs=pl.BlockSpec((TN, D), lambda i: (i, 0)),
        compiler_params=pltpu.CompilerParams(
            dimension_semantics=("parallel",),
            vmem_limit_bytes=VMEM_LIMIT_BYTES),
        cost_estimate=cost,
    )(xf,
      ln_g.reshape(1, K).astype(jnp.float32),
      ln_b.reshape(1, K).astype(jnp.float32),
      wk)
    return out.reshape(B, H2, W2, D)


# ---------------------------- parameter init --------------------------------

def init_params(key, patch_size, in_chans, embed_dim, num_layers):
    params = {}
    k = jax.random.split(key, 2 + 2 * num_layers)
    fan_in = in_chans * patch_size * patch_size
    params["pe_w"] = jax.random.uniform(
        k[0], (embed_dim, in_chans, patch_size, patch_size),
        minval=-1.0 / math.sqrt(fan_in), maxval=1.0 / math.sqrt(fan_in),
        dtype=jnp.float32)
    params["pe_b"] = jax.random.uniform(
        k[1], (embed_dim,), minval=-1.0 / math.sqrt(fan_in),
        maxval=1.0 / math.sqrt(fan_in), dtype=jnp.float32)
    params["pe_g"] = jnp.ones((embed_dim,), jnp.float32)
    params["pe_beta"] = jnp.zeros((embed_dim,), jnp.float32)
    dim = embed_dim
    for i in range(num_layers - 1):
        params[f"pm{i}_g"] = jnp.ones((4 * dim,), jnp.float32)
        params[f"pm{i}_b"] = jnp.zeros((4 * dim,), jnp.float32)
        params[f"pm{i}_w"] = 0.02 * jax.random.normal(
            k[2 + i], (2 * dim, 4 * dim), dtype=jnp.float32)
        dim *= 2
    return params


# ------------------------------ VSSM forward ---------------------------------

@partial(jax.jit, static_argnums=(2, 3))
def vssm_forward(x_nchw, params, patch_size, num_layers):
    # forward_features: patch_embed -> pos_drop(p=0.0, identity) -> layers
    s = patch_embed(x_nchw, params["pe_w"], params["pe_b"],
                    params["pe_g"], params["pe_beta"], patch_size)
    skip_list = [s]
    for i in range(num_layers):
        # TODO(synk): MamberBlock blocks (undefined in reference source) -> identity
        if i < num_layers - 1:
            s = patch_merging(s, params[f"pm{i}_g"], params[f"pm{i}_b"],
                              params[f"pm{i}_w"])
        if i + 1 < num_layers:
            skip_list.append(s)
    # VSSM.forward returns (skip_list[0], skip_list[1], skip_list[2], skip_list[3])
    return tuple(skip_list[:4])


# --------------------- pure-JAX f32 reference (torch order) ------------------

def _layernorm_ref(x, g, b):
    mu = jnp.mean(x, axis=-1, keepdims=True)
    var = jnp.mean(jnp.square(x - mu), axis=-1, keepdims=True)
    return (x - mu) / jnp.sqrt(var + LN_EPS) * g + b


def reference_forward(x_nchw, params, patch_size, num_layers):
    B, C, H, W = x_nchw.shape
    p = patch_size
    D = params["pe_w"].shape[0]
    Hp, Wp = H // p, W // p
    xp = x_nchw.reshape(B, C, Hp, p, Wp, p)
    xp = jnp.transpose(xp, (0, 2, 4, 1, 3, 5)).reshape(B, Hp, Wp, C * p * p)
    y = xp @ params["pe_w"].reshape(D, C * p * p).T + params["pe_b"]
    s = _layernorm_ref(y, params["pe_g"], params["pe_beta"])
    skips = [s]
    for i in range(num_layers - 1):
        x0 = s[:, 0::2, 0::2, :]
        x1 = s[:, 1::2, 0::2, :]
        x2 = s[:, 0::2, 1::2, :]
        x3 = s[:, 1::2, 1::2, :]
        xc = jnp.concatenate([x0, x1, x2, x3], axis=-1)
        xc = _layernorm_ref(xc, params[f"pm{i}_g"], params[f"pm{i}_b"])
        s = xc @ params[f"pm{i}_w"].T
        skips.append(s)
    return skips[:4]


if __name__ == "__main__":
    B, C_IN, H, W = 2, 3, 32, 32
    PATCH = 4
    EMBED = 32           # dims = [32, 64, 128, 256]
    NUM_LAYERS = 4

    key = jax.random.PRNGKey(0)
    kx, kp = jax.random.split(key)
    x = jax.random.normal(kx, (B, C_IN, H, W), dtype=jnp.float32)
    params = init_params(kp, PATCH, C_IN, EMBED, NUM_LAYERS)

    outs = vssm_forward(x, params, PATCH, NUM_LAYERS)
    outs = jax.block_until_ready(outs)

    expected = [
        (B, H // PATCH, W // PATCH, EMBED),
        (B, H // (2 * PATCH), W // (2 * PATCH), 2 * EMBED),
        (B, H // (4 * PATCH), W // (4 * PATCH), 4 * EMBED),
        (B, H // (8 * PATCH), W // (8 * PATCH), 8 * EMBED),
    ]
    refs = reference_forward(x, params, PATCH, NUM_LAYERS)
    for o, r, e in zip(outs, refs, expected):
        assert tuple(o.shape) == e, (o.shape, e)
        assert bool(jnp.all(jnp.isfinite(o)))
        diff = float(jnp.max(jnp.abs(o.astype(jnp.float32) - r)))
        assert diff < 0.15, f"max |pallas - ref| = {diff}"   # bf16-level agreement

    print("KERNEL_OK")
</pallas_src>

<mosaic_0001>
module attributes {stable_mosaic.version = 11 : i64} {
  func.func @_patch_embed_kernel(%arg0: i32, %arg1: memref<128x48xbf16, #tpu.memory_space<vmem>>, %arg2: memref<48x32xbf16, #tpu.memory_space<vmem>>, %arg3: memref<1x32xf32, #tpu.memory_space<vmem>>, %arg4: memref<1x32xf32, #tpu.memory_space<vmem>>, %arg5: memref<1x32xf32, #tpu.memory_space<vmem>>, %arg6: memref<128x32xbf16, #tpu.memory_space<vmem>>) attributes {dimension_semantics = [#tpu.dimension_semantics<parallel>], iteration_bounds = array<i64: 1>, scalar_prefetch = 0 : i64, scratch_operands = 0 : i64, tpu.core_type = #tpu.core_type<tc>, window_params = [{transform_indices = @transform_0, window_bounds = array<i64: 128, 48>}, {pipeline_mode = #tpu.pipeline_mode<synchronous>, transform_indices = @transform_1, window_bounds = array<i64: 48, 32>}, {pipeline_mode = #tpu.pipeline_mode<synchronous>, transform_indices = @transform_2, window_bounds = array<i64: 1, 32>}, {pipeline_mode = #tpu.pipeline_mode<synchronous>, transform_indices = @transform_3, window_bounds = array<i64: 1, 32>}, {pipeline_mode = #tpu.pipeline_mode<synchronous>, transform_indices = @transform_4, window_bounds = array<i64: 1, 32>}, {transform_indices = @transform_5, window_bounds = array<i64: 128, 32>}]} {
    %c0 = arith.constant 0 : index
    %c0_0 = arith.constant 0 : index
    %0 = vector.load %arg1[%c0, %c0_0] : memref<128x48xbf16, #tpu.memory_space<vmem>>, vector<128x48xbf16>
    %c0_1 = arith.constant 0 : index
    %c0_2 = arith.constant 0 : index
    %1 = vector.load %arg2[%c0_1, %c0_2] : memref<48x32xbf16, #tpu.memory_space<vmem>>, vector<48x32xbf16>
    %cst = arith.constant dense<0.000000e+00> : vector<128x32xf32>
    %2 = tpu.matmul %0, %1, %cst {dimension_numbers = #tpu.dot_dimension_numbers<[1], [0], [0], [1], [0, 0, 1, 1], [], []>} : vector<128x48xbf16>, vector<48x32xbf16>, vector<128x32xf32> -> vector<128x32xf32>
    %c0_3 = arith.constant 0 : index
    %c0_4 = arith.constant 0 : index
    %3 = vector.load %arg3[%c0_3, %c0_4] : memref<1x32xf32, #tpu.memory_space<vmem>>, vector<1x32xf32>
    %4 = vector.broadcast %3 : vector<1x32xf32> to vector<128x32xf32>
    %5 = arith.addf %2, %4 : vector<128x32xf32>
    %cst_5 = arith.constant dense<0.000000e+00> : vector<128xf32>
    %6 = vector.multi_reduction <add>, %5, %cst_5 [1] : vector<128x32xf32> to vector<128xf32>
    %7 = vector.shape_cast %6 : vector<128xf32> to vector<128x1xf32>
    %cst_6 = arith.constant 3.200000e+01 : f32
    %8 = vector.broadcast %cst_6 : f32 to vector<128x1xf32>
    %9 = arith.divf %7, %8 : vector<128x1xf32>
    %10 = arith.mulf %5, %5 : vector<128x32xf32>
    %cst_7 = arith.constant dense<0.000000e+00> : vector<128xf32>
    %11 = vector.multi_reduction <add>, %10, %cst_7 [1] : vector<128x32xf32> to vector<128xf32>
    %12 = vector.shape_cast %11 : vector<128xf32> to vector<128x1xf32>
    %cst_8 = arith.constant 3.200000e+01 : f32
    %13 = vector.broadcast %cst_8 : f32 to vector<128x1xf32>
    %14 = arith.divf %12, %13 : vector<128x1xf32>
    %15 = arith.mulf %9, %9 : vector<128x1xf32>
    %16 = arith.subf %14, %15 : vector<128x1xf32>
    %cst_9 = arith.constant 0.000000e+00 : f32
    %17 = vector.broadcast %cst_9 : f32 to vector<128x1xf32>
    %18 = arith.maximumf %16, %17 : vector<128x1xf32>
    %19 = vector.broadcast %9 : vector<128x1xf32> to vector<128x32xf32>
    %20 = arith.subf %5, %19 : vector<128x32xf32>
    %cst_10 = arith.constant 9.99999974E-6 : f32
    %21 = vector.broadcast %cst_10 : f32 to vector<128x1xf32>
    %22 = arith.addf %18, %21 : vector<128x1xf32>
    %23 = math.rsqrt %22 : vector<128x1xf32>
    %24 = vector.broadcast %23 : vector<128x1xf32> to vector<128x32xf32>
    %25 = arith.mulf %20, %24 : vector<128x32xf32>
    %c0_11 = arith.constant 0 : index
    %c0_12 = arith.constant 0 : index
    %26 = vector.load %arg4[%c0_11, %c0_12] : memref<1x32xf32, #tpu.memory_space<vmem>>, vector<1x32xf32>
    %27 = vector.broadcast %26 : vector<1x32xf32> to vector<128x32xf32>
    %28 = arith.mulf %25, %27 : vector<128x32xf32>
    %c0_13 = arith.constant 0 : index
    %c0_14 = arith.constant 0 : index
    %29 = vector.load %arg5[%c0_13, %c0_14] : memref<1x32xf32, #tpu.memory_space<vmem>>, vector<1x32xf32>
    %30 = vector.broadcast %29 : vector<1x32xf32> to vector<128x32xf32>
    %31 = arith.addf %28, %30 : vector<128x32xf32>
    %32 = arith.truncf %31 : vector<128x32xf32> to vector<128x32xbf16>
    %c0_15 = arith.constant 0 : index
    %c0_16 = arith.constant 0 : index
    %33 = vector.load %arg6[%c0_15, %c0_16] : memref<128x32xbf16, #tpu.memory_space<vmem>>, vector<128x32xbf16>
    tpu.vector_store %arg6[%c0_15, %c0_16], %32 {strides = array<i32>} : memref<128x32xbf16, #tpu.memory_space<vmem>>, vector<128x32xbf16>,
    return
  }
  func.func @transform_0(%arg0: i32) -> (i32, i32) {
    %c0_i32 = arith.constant 0 : i32
    %c0_i32_0 = arith.constant 0 : i32
    return %arg0, %c0_i32 : i32, i32
  }
  func.func @transform_1(%arg0: i32) -> (i32, i32) {
    %c0_i32 = arith.constant 0 : i32
    %c0_i32_0 = arith.constant 0 : i32
    %c0_i32_1 = arith.constant 0 : i32
    return %c0_i32, %c0_i32_0 : i32, i32
  }
  func.func @transform_2(%arg0: i32) -> (i32, i32) {
    %c0_i32 = arith.constant 0 : i32
    %c0_i32_0 = arith.constant 0 : i32
    %c0_i32_1 = arith.constant 0 : i32
    return %c0_i32, %c0_i32_0 : i32, i32
  }
  func.func @transform_3(%arg0: i32) -> (i32, i32) {
    %c0_i32 = arith.constant 0 : i32
    %c0_i32_0 = arith.constant 0 : i32
    %c0_i32_1 = arith.constant 0 : i32
    return %c0_i32, %c0_i32_0 : i32, i32
  }
  func.func @transform_4(%arg0: i32) -> (i32, i32) {
    %c0_i32 = arith.constant 0 : i32
    %c0_i32_0 = arith.constant 0 : i32
    %c0_i32_1 = arith.constant 0 : i32
    return %c0_i32, %c0_i32_0 : i32, i32
  }
  func.func @transform_5(%arg0: i32) -> (i32, i32) {
    %c0_i32 = arith.constant 0 : i32
    %c0_i32_0 = arith.constant 0 : i32
    return %arg0, %c0_i32 : i32, i32
  }
}

module attributes {stable_mosaic.version = 11 : i64} {
  func.func @_patch_merge_kernel(%arg0: i32, %arg1: memref<32x128xbf16, #tpu.memory_space<vmem>>, %arg2: memref<1x128xf32, #tpu.memory_space<vmem>>, %arg3: memref<1x128xf32, #tpu.memory_space<vmem>>, %arg4: memref<128x64xbf16, #tpu.memory_space<vmem>>, %arg5: memref<32x64xbf16, #tpu.memory_space<vmem>>) attributes {dimension_semantics = [#tpu.dimension_semantics<parallel>], iteration_bounds = array<i64: 1>, scalar_prefetch = 0 : i64, scratch_operands = 0 : i64, tpu.core_type = #tpu.core_type<tc>, window_params = [{transform_indices = @transform_0, window_bounds = array<i64: 32, 128>}, {pipeline_mode = #tpu.pipeline_mode<synchronous>, transform_indices = @transform_1, window_bounds = array<i64: 1, 128>}, {pipeline_mode = #tpu.pipeline_mode<synchronous>, transform_indices = @transform_2, window_bounds = array<i64: 1, 128>}, {pipeline_mode = #tpu.pipeline_mode<synchronous>, transform_indices = @transform_3, window_bounds = array<i64: 128, 64>}, {transform_indices = @transform_4, window_bounds = array<i64: 32, 64>}]} {
    %c0 = arith.constant 0 : index
    %c0_0 = arith.constant 0 : index
    %0 = vector.load %arg1[%c0, %c0_0] : memref<32x128xbf16, #tpu.memory_space<vmem>>, vector<32x128xbf16>
    %1 = arith.extf %0 : vector<32x128xbf16> to vector<32x128xf32>
    %cst = arith.constant dense<0.000000e+00> : vector<32xf32>
    %2 = vector.multi_reduction <add>, %1, %cst [1] : vector<32x128xf32> to vector<32xf32>
    %3 = vector.shape_cast %2 : vector<32xf32> to vector<32x1xf32>
    %cst_1 = arith.constant 1.280000e+02 : f32
    %4 = vector.broadcast %cst_1 : f32 to vector<32x1xf32>
    %5 = arith.divf %3, %4 : vector<32x1xf32>
    %6 = arith.mulf %1, %1 : vector<32x128xf32>
    %cst_2 = arith.constant dense<0.000000e+00> : vector<32xf32>
    %7 = vector.multi_reduction <add>, %6, %cst_2 [1] : vector<32x128xf32> to vector<32xf32>
    %8 = vector.shape_cast %7 : vector<32xf32> to vector<32x1xf32>
    %cst_3 = arith.constant 1.280000e+02 : f32
    %9 = vector.broadcast %cst_3 : f32 to vector<32x1xf32>
    %10 = arith.divf %8, %9 : vector<32x1xf32>
    %11 = arith.mulf %5, %5 : vector<32x1xf32>
    %12 = arith.subf %10, %11 : vector<32x1xf32>
    %cst_4 = arith.constant 0.000000e+00 : f32
    %13 = vector.broadcast %cst_4 : f32 to vector<32x1xf32>
    %14 = arith.maximumf %12, %13 : vector<32x1xf32>
    %15 = vector.broadcast %5 : vector<32x1xf32> to vector<32x128xf32>
    %16 = arith.subf %1, %15 : vector<32x128xf32>
    %cst_5 = arith.constant 9.99999974E-6 : f32
    %17 = vector.broadcast %cst_5 : f32 to vector<32x1xf32>
    %18 = arith.addf %14, %17 : vector<32x1xf32>
    %19 = math.rsqrt %18 : vector<32x1xf32>
    %20 = vector.broadcast %19 : vector<32x1xf32> to vector<32x128xf32>
    %21 = arith.mulf %16, %20 : vector<32x128xf32>
    %c0_6 = arith.constant 0 : index
    %c0_7 = arith.constant 0 : index
    %22 = vector.load %arg2[%c0_6, %c0_7] : memref<1x128xf32, #tpu.memory_space<vmem>>, vector<1x128xf32>
    %23 = vector.broadcast %22 : vector<1x128xf32> to vector<32x128xf32>
    %24 = arith.mulf %21, %23 : vector<32x128xf32>
    %c0_8 = arith.constant 0 : index
    %c0_9 = arith.constant 0 : index
    %25 = vector.load %arg3[%c0_8, %c0_9] : memref<1x128xf32, #tpu.memory_space<vmem>>, vector<1x128xf32>
    %26 = vector.broadcast %25 : vector<1x128xf32> to vector<32x128xf32>
    %27 = arith.addf %24, %26 : vector<32x128xf32>
    %28 = arith.truncf %27 : vector<32x128xf32> to vector<32x128xbf16>
    %c0_10 = arith.constant 0 : index
    %c0_11 = arith.constant 0 : index
    %29 = vector.load %arg4[%c0_10, %c0_11] : memref<128x64xbf16, #tpu.memory_space<vmem>>, vector<128x64xbf16>
    %cst_12 = arith.constant dense<0.000000e+00> : vector<32x64xf32>
    %30 = tpu.matmul %28, %29, %cst_12 {dimension_numbers = #tpu.dot_dimension_numbers<[1], [0], [0], [1], [0, 0, 1, 1], [], []>} : vector<32x128xbf16>, vector<128x64xbf16>, vector<32x64xf32> -> vector<32x64xf32>
    %31 = arith.truncf %30 : vector<32x64xf32> to vector<32x64xbf16>
    %c0_13 = arith.constant 0 : index
    %c0_14 = arith.constant 0 : index
    %32 = vector.load %arg5[%c0_13, %c0_14] : memref<32x64xbf16, #tpu.memory_space<vmem>>, vector<32x64xbf16>
    tpu.vector_store %arg5[%c0_13, %c0_14], %31 {strides = array<i32>} : memref<32x64xbf16, #tpu.memory_space<vmem>>, vector<32x64xbf16>,
    return
  }
  func.func @transform_0(%arg0: i32) -> (i32, i32) {
    %c0_i32 = arith.constant 0 : i32
    %c0_i32_0 = arith.constant 0 : i32
    return %arg0, %c0_i32 : i32, i32
  }
  func.func @transform_1(%arg0: i32) -> (i32, i32) {
    %c0_i32 = arith.constant 0 : i32
    %c0_i32_0 = arith.constant 0 : i32
    %c0_i32_1 = arith.constant 0 : i32
    return %c0_i32, %c0_i32_0 : i32, i32
  }
  func.func @transform_2(%arg0: i32) -> (i32, i32) {
    %c0_i32 = arith.constant 0 : i32
    %c0_i32_0 = arith.constant 0 : i32
    %c0_i32_1 = arith.constant 0 : i32
    return %c0_i32, %c0_i32_0 : i32, i32
  }
  func.func @transform_3(%arg0: i32) -> (i32, i32) {
    %c0_i32 = arith.constant 0 : i32
    %c0_i32_0 = arith.constant 0 : i32
    %c0_i32_1 = arith.constant 0 : i32
    return %c0_i32, %c0_i32_0 : i32, i32
  }
  func.func @transform_4(%arg0: i32) -> (i32, i32) {
    %c0_i32 = arith.constant 0 : i32
    %c0_i32_0 = arith.constant 0 : i32
    return %arg0, %c0_i32 : i32, i32
  }
}

module attributes {stable_mosaic.version = 11 : i64} {
  func.func @_patch_merge_kernel(%arg0: i32, %arg1: memref<8x256xbf16, #tpu.memory_space<vmem>>, %arg2: memref<1x256xf32, #tpu.memory_space<vmem>>, %arg3: memref<1x256xf32, #tpu.memory_space<vmem>>, %arg4: memref<256x128xbf16, #tpu.memory_space<vmem>>, %arg5: memref<8x128xbf16, #tpu.memory_space<vmem>>) attributes {dimension_semantics = [#tpu.dimension_semantics<parallel>], iteration_bounds = array<i64: 1>, scalar_prefetch = 0 : i64, scratch_operands = 0 : i64, tpu.core_type = #tpu.core_type<tc>, window_params = [{transform_indices = @transform_0, window_bounds = array<i64: 8, 256>}, {pipeline_mode = #tpu.pipeline_mode<synchronous>, transform_indices = @transform_1, window_bounds = array<i64: 1, 256>}, {pipeline_mode = #tpu.pipeline_mode<synchronous>, transform_indices = @transform_2, window_bounds = array<i64: 1, 256>}, {pipeline_mode = #tpu.pipeline_mode<synchronous>, transform_indices = @transform_3, window_bounds = array<i64: 256, 128>}, {transform_indices = @transform_4, window_bounds = array<i64: 8, 128>}]} {
    %c0 = arith.constant 0 : index
    %c0_0 = arith.constant 0 : index
    %0 = vector.load %arg1[%c0, %c0_0] : memref<8x256xbf16, #tpu.memory_space<vmem>>, vector<8x256xbf16>
    %1 = arith.extf %0 : vector<8x256xbf16> to vector<8x256xf32>
    %cst = arith.constant dense<0.000000e+00> : vector<8xf32>
    %2 = vector.multi_reduction <add>, %1, %cst [1] : vector<8x256xf32> to vector<8xf32>
    %3 = vector.shape_cast %2 : vector<8xf32> to vector<8x1xf32>
    %cst_1 = arith.constant 2.560000e+02 : f32
    %4 = vector.broadcast %cst_1 : f32 to vector<8x1xf32>
    %5 = arith.divf %3, %4 : vector<8x1xf32>
    %6 = arith.mulf %1, %1 : vector<8x256xf32>
    %cst_2 = arith.constant dense<0.000000e+00> : vector<8xf32>
    %7 = vector.multi_reduction <add>, %6, %cst_2 [1] : vector<8x256xf32> to vector<8xf32>
    %8 = vector.shape_cast %7 : vector<8xf32> to vector<8x1xf32>
    %cst_3 = arith.constant 2.560000e+02 : f32
    %9 = vector.broadcast %cst_3 : f32 to vector<8x1xf32>
    %10 = arith.divf %8, %9 : vector<8x1xf32>
    %11 = arith.mulf %5, %5 : vector<8x1xf32>
    %12 = arith.subf %10, %11 : vector<8x1xf32>
    %cst_4 = arith.constant 0.000000e+00 : f32
    %13 = vector.broadcast %cst_4 : f32 to vector<8x1xf32>
    %14 = arith.maximumf %12, %13 : vector<8x1xf32>
    %15 = vector.broadcast %5 : vector<8x1xf32> to vector<8x256xf32>
    %16 = arith.subf %1, %15 : vector<8x256xf32>
    %cst_5 = arith.constant 9.99999974E-6 : f32
    %17 = vector.broadcast %cst_5 : f32 to vector<8x1xf32>
    %18 = arith.addf %14, %17 : vector<8x1xf32>
    %19 = math.rsqrt %18 : vector<8x1xf32>
    %20 = vector.broadcast %19 : vector<8x1xf32> to vector<8x256xf32>
    %21 = arith.mulf %16, %20 : vector<8x256xf32>
    %c0_6 = arith.constant 0 : index
    %c0_7 = arith.constant 0 : index
    %22 = vector.load %arg2[%c0_6, %c0_7] : memref<1x256xf32, #tpu.memory_space<vmem>>, vector<1x256xf32>
    %23 = vector.broadcast %22 : vector<1x256xf32> to vector<8x256xf32>
    %24 = arith.mulf %21, %23 : vector<8x256xf32>
    %c0_8 = arith.constant 0 : index
    %c0_9 = arith.constant 0 : index
    %25 = vector.load %arg3[%c0_8, %c0_9] : memref<1x256xf32, #tpu.memory_space<vmem>>, vector<1x256xf32>
    %26 = vector.broadcast %25 : vector<1x256xf32> to vector<8x256xf32>
    %27 = arith.addf %24, %26 : vector<8x256xf32>
    %28 = arith.truncf %27 : vector<8x256xf32> to vector<8x256xbf16>
    %c0_10 = arith.constant 0 : index
    %c0_11 = arith.constant 0 : index
    %29 = vector.load %arg4[%c0_10, %c0_11] : memref<256x128xbf16, #tpu.memory_space<vmem>>, vector<256x128xbf16>
    %cst_12 = arith.constant dense<0.000000e+00> : vector<8x128xf32>
    %30 = tpu.matmul %28, %29, %cst_12 {dimension_numbers = #tpu.dot_dimension_numbers<[1], [0], [0], [1], [0, 0, 1, 1], [], []>} : vector<8x256xbf16>, vector<256x128xbf16>, vector<8x128xf32> -> vector<8x128xf32>
    %31 = arith.truncf %30 : vector<8x128xf32> to vector<8x128xbf16>
    %c0_13 = arith.constant 0 : index
    %c0_14 = arith.constant 0 : index
    %32 = vector.load %arg5[%c0_13, %c0_14] : memref<8x128xbf16, #tpu.memory_space<vmem>>, vector<8x128xbf16>
    tpu.vector_store %arg5[%c0_13, %c0_14], %31 {strides = array<i32>} : memref<8x128xbf16, #tpu.memory_space<vmem>>, vector<8x128xbf16>,
    return
  }
  func.func @transform_0(%arg0: i32) -> (i32, i32) {
    %c0_i32 = arith.constant 0 : i32
    %c0_i32_0 = arith.constant 0 : i32
    return %arg0, %c0_i32 : i32, i32
  }
  func.func @transform_1(%arg0: i32) -> (i32, i32) {
    %c0_i32 = arith.constant 0 : i32
    %c0_i32_0 = arith.constant 0 : i32
    %c0_i32_1 = arith.constant 0 : i32
    return %c0_i32, %c0_i32_0 : i32, i32
  }
  func.func @transform_2(%arg0: i32) -> (i32, i32) {
    %c0_i32 = arith.constant 0 : i32
    %c0_i32_0 = arith.constant 0 : i32
    %c0_i32_1 = arith.constant 0 : i32
    return %c0_i32, %c0_i32_0 : i32, i32
  }
  func.func @transform_3(%arg0: i32) -> (i32, i32) {
    %c0_i32 = arith.constant 0 : i32
    %c0_i32_0 = arith.constant 0 : i32
    %c0_i32_1 = arith.constant 0 : i32
    return %c0_i32, %c0_i32_0 : i32, i32
  }
  func.func @transform_4(%arg0: i32) -> (i32, i32) {
    %c0_i32 = arith.constant 0 : i32
    %c0_i32_0 = arith.constant 0 : i32
    return %arg0, %c0_i32 : i32, i32
  }
}

module attributes {stable_mosaic.version = 11 : i64} {
  func.func @_patch_merge_kernel(%arg0: i32, %arg1: memref<2x512xbf16, #tpu.memory_space<vmem>>, %arg2: memref<1x512xf32, #tpu.memory_space<vmem>>, %arg3: memref<1x512xf32, #tpu.memory_space<vmem>>, %arg4: memref<512x256xbf16, #tpu.memory_space<vmem>>, %arg5: memref<2x256xbf16, #tpu.memory_space<vmem>>) attributes {dimension_semantics = [#tpu.dimension_semantics<parallel>], iteration_bounds = array<i64: 1>, scalar_prefetch = 0 : i64, scratch_operands = 0 : i64, tpu.core_type = #tpu.core_type<tc>, window_params = [{transform_indices = @transform_0, window_bounds = array<i64: 2, 512>}, {pipeline_mode = #tpu.pipeline_mode<synchronous>, transform_indices = @transform_1, window_bounds = array<i64: 1, 512>}, {pipeline_mode = #tpu.pipeline_mode<synchronous>, transform_indices = @transform_2, window_bounds = array<i64: 1, 512>}, {pipeline_mode = #tpu.pipeline_mode<synchronous>, transform_indices = @transform_3, window_bounds = array<i64: 512, 256>}, {transform_indices = @transform_4, window_bounds = array<i64: 2, 256>}]} {
    %c0 = arith.constant 0 : index
    %c0_0 = arith.constant 0 : index
    %0 = vector.load %arg1[%c0, %c0_0] : memref<2x512xbf16, #tpu.memory_space<vmem>>, vector<2x512xbf16>
    %1 = arith.extf %0 : vector<2x512xbf16> to vector<2x512xf32>
    %cst = arith.constant dense<0.000000e+00> : vector<2xf32>
    %2 = vector.multi_reduction <add>, %1, %cst [1] : vector<2x512xf32> to vector<2xf32>
    %3 = vector.shape_cast %2 : vector<2xf32> to vector<2x1xf32>
    %cst_1 = arith.constant 5.120000e+02 : f32
    %4 = vector.broadcast %cst_1 : f32 to vector<2x1xf32>
    %5 = arith.divf %3, %4 : vector<2x1xf32>
    %6 = arith.mulf %1, %1 : vector<2x512xf32>
    %cst_2 = arith.constant dense<0.000000e+00> : vector<2xf32>
    %7 = vector.multi_reduction <add>, %6, %cst_2 [1] : vector<2x512xf32> to vector<2xf32>
    %8 = vector.shape_cast %7 : vector<2xf32> to vector<2x1xf32>
    %cst_3 = arith.constant 5.120000e+02 : f32
    %9 = vector.broadcast %cst_3 : f32 to vector<2x1xf32>
    %10 = arith.divf %8, %9 : vector<2x1xf32>
    %11 = arith.mulf %5, %5 : vector<2x1xf32>
    %12 = arith.subf %10, %11 : vector<2x1xf32>
    %cst_4 = arith.constant 0.000000e+00 : f32
    %13 = vector.broadcast %cst_4 : f32 to vector<2x1xf32>
    %14 = arith.maximumf %12, %13 : vector<2x1xf32>
    %15 = vector.broadcast %5 : vector<2x1xf32> to vector<2x512xf32>
    %16 = arith.subf %1, %15 : vector<2x512xf32>
    %cst_5 = arith.constant 9.99999974E-6 : f32
    %17 = vector.broadcast %cst_5 : f32 to vector<2x1xf32>
    %18 = arith.addf %14, %17 : vector<2x1xf32>
    %19 = math.rsqrt %18 : vector<2x1xf32>
    %20 = vector.broadcast %19 : vector<2x1xf32> to vector<2x512xf32>
    %21 = arith.mulf %16, %20 : vector<2x512xf32>
    %c0_6 = arith.constant 0 : index
    %c0_7 = arith.constant 0 : index
    %22 = vector.load %arg2[%c0_6, %c0_7] : memref<1x512xf32, #tpu.memory_space<vmem>>, vector<1x512xf32>
    %23 = vector.broadcast %22 : vector<1x512xf32> to vector<2x512xf32>
    %24 = arith.mulf %21, %23 : vector<2x512xf32>
    %c0_8 = arith.constant 0 : index
    %c0_9 = arith.constant 0 : index
    %25 = vector.load %arg3[%c0_8, %c0_9] : memref<1x512xf32, #tpu.memory_space<vmem>>, vector<1x512xf32>
    %26 = vector.broadcast %25 : vector<1x512xf32> to vector<2x512xf32>
    %27 = arith.addf %24, %26 : vector<2x512xf32>
    %28 = arith.truncf %27 : vector<2x512xf32> to vector<2x512xbf16>
    %c0_10 = arith.constant 0 : index
    %c0_11 = arith.constant 0 : index
    %29 = vector.load %arg4[%c0_10, %c0_11] : memref<512x256xbf16, #tpu.memory_space<vmem>>, vector<512x256xbf16>
    %cst_12 = arith.constant dense<0.000000e+00> : vector<2x256xf32>
    %30 = tpu.matmul %28, %29, %cst_12 {dimension_numbers = #tpu.dot_dimension_numbers<[1], [0], [0], [1], [0, 0, 1, 1], [], []>} : vector<2x512xbf16>, vector<512x256xbf16>, vector<2x256xf32> -> vector<2x256xf32>
    %31 = arith.truncf %30 : vector<2x256xf32> to vector<2x256xbf16>
    %c0_13 = arith.constant 0 : index
    %c0_14 = arith.constant 0 : index
    %32 = vector.load %arg5[%c0_13, %c0_14] : memref<2x256xbf16, #tpu.memory_space<vmem>>, vector<2x256xbf16>
    tpu.vector_store %arg5[%c0_13, %c0_14], %31 {strides = array<i32>} : memref<2x256xbf16, #tpu.memory_space<vmem>>, vector<2x256xbf16>,
    return
  }
  func.func @transform_0(%arg0: i32) -> (i32, i32) {
    %c0_i32 = arith.constant 0 : i32
    %c0_i32_0 = arith.constant 0 : i32
    return %arg0, %c0_i32 : i32, i32
  }
  func.func @transform_1(%arg0: i32) -> (i32, i32) {
    %c0_i32 = arith.constant 0 : i32
    %c0_i32_0 = arith.constant 0 : i32
    %c0_i32_1 = arith.constant 0 : i32
    return %c0_i32, %c0_i32_0 : i32, i32
  }
  func.func @transform_2(%arg0: i32) -> (i32, i32) {
    %c0_i32 = arith.constant 0 : i32
    %c0_i32_0 = arith.constant 0 : i32
    %c0_i32_1 = arith.constant 0 : i32
    return %c0_i32, %c0_i32_0 : i32, i32
  }
  func.func @transform_3(%arg0: i32) -> (i32, i32) {
    %c0_i32 = arith.constant 0 : i32
    %c0_i32_0 = arith.constant 0 : i32
    %c0_i32_1 = arith.constant 0 : i32
    return %c0_i32, %c0_i32_0 : i32, i32
  }
  func.func @transform_4(%arg0: i32) -> (i32, i32) {
    %c0_i32 = arith.constant 0 : i32
    %c0_i32_0 = arith.constant 0 : i32
    return %arg0, %c0_i32 : i32, i32
  }
}

</mosaic_0001>

<llo_original>
// kernel: vssm_forward.4
$region0: #{vssm_forward.4}
  #allocation0 [shape = 'u32[]', space=smem, size = 0x4, offset = 0x4, fixed_abs, tag = 'smem constant byte address 0x4 - core index']
  #allocation1 [shape = 'u32[144,128]{1,0:T(1,128)}', space=vmem, size = 0x12000, scoped, tag = 'internal scratch']
  %s0 = inlined_call_operand.vmem [shape: bf16[128,48], index: 0, kind: input, shape index: {}]
  %s1 = inlined_call_operand.vmem [shape: bf16[48,32], index: 1, kind: input, shape index: {}]
  %s2 = inlined_call_operand.vmem [shape: f32[1,32], index: 2, kind: input, shape index: {}]
  %s3 = inlined_call_operand.vmem [shape: f32[1,32], index: 3, kind: input, shape index: {}]
  %s4 = inlined_call_operand.vmem [shape: f32[1,32], index: 4, kind: input, shape index: {}]
  %s5 = inlined_call_operand.vmem [shape: bf16[128,32], index: 5, kind: output, shape index: {}]
  %s6 = sld [smem:[#allocation0]]
  $region30: #{vssm_forward.4} parent=0
    _
  %s8 = ssub.s32 1, %s6
  %s9 = scalar_select 0, %s8, %s6
  // Predicated region
  $region2: #{vssm_forward.4} parent=0 // pred_check
    _
  $region3: #{vssm_forward.4} parent=0 // pred_check_branch
    %11 = sbr.rel (0) target = $region5
  $region4: #{vssm_forward.4} parent=0 // pred_region
    _
  $region5: #{vssm_forward.4} parent=0 // pred_fallthru
    _
  // Predicated region
  $region6: #{vssm_forward.4} parent=0 // pred_check
    _
  $region7: #{vssm_forward.4} parent=0 // pred_check_branch
    %13 = sbr.rel (0) target = $region9
  $region8: #{vssm_forward.4} parent=0 // pred_region
    _
  $region9: #{vssm_forward.4} parent=0 // pred_fallthru
    _
  // Predicated region
  $region10: #{vssm_forward.4} parent=0 // pred_check
    _
  $region11: #{vssm_forward.4} parent=0 // pred_check_branch
    %15 = sbr.rel (0) target = $region13
  $region12: #{vssm_forward.4} parent=0 // pred_region
    _
  $region13: #{vssm_forward.4} parent=0 // pred_fallthru
    _
  // Predicated region
  $region14: #{vssm_forward.4} parent=0 // pred_check
    _
  $region15: #{vssm_forward.4} parent=0 // pred_check_branch
    %17 = sbr.rel (0) target = $region17
  $region16: #{vssm_forward.4} parent=0 // pred_region
    _
  $region17: #{vssm_forward.4} parent=0 // pred_fallthru
    _
  // Predicated region
  $region18: #{vssm_forward.4} parent=0 // pred_check
    _
  $region19: #{vssm_forward.4} parent=0 // pred_check_branch
    %19 = sbr.rel (0) target = $region21
  $region20: #{vssm_forward.4} parent=0 // pred_region
    _
  $region21: #{vssm_forward.4} parent=0 // pred_fallthru
    _
  %v21 = vld [vmem:[%s0] sm:$0xf]
  %v22 = vld [vmem:[%s0 + $0x4] sm:$0xf]
  %v23 = vld [vmem:[%s0 + $0x8] sm:$0xf]
  %v24 = vld [vmem:[%s0 + $0xc] sm:$0xf]
  %v25 = vld [vmem:[%s0 + $0x10] sm:$0xf]
  %v26 = vld [vmem:[%s0 + $0x14] sm:$0xf]
  %v27 = vld [vmem:[%s0 + $0x18] sm:$0xf]
  %v28 = vld [vmem:[%s0 + $0x1c] sm:$0xf]
  %v29 = vld [vmem:[%s0 + $0x20] sm:$0xf]
  %v30 = vld [vmem:[%s0 + $0x24] sm:$0xf]
  %v31 = vld [vmem:[%s0 + $0x28] sm:$0xf]
  %v32 = vld [vmem:[%s0 + $0x2c] sm:$0xf]
  %v33 = vld [vmem:[%s0 + $0x30] sm:$0xf]
  %v34 = vld [vmem:[%s0 + $0x34] sm:$0xf]
  %v35 = vld [vmem:[%s0 + $0x38] sm:$0xf]
  %v36 = vld [vmem:[%s0 + $0x3c] sm:$0xf]
  %v37 = vld [vmem:[%s1] sm:$0xf]
  %v38 = vld [vmem:[%s1 + $0x4] sm:$0xf]
  %v39 = vld [vmem:[%s1 + $0x8] sm:$0xf]
  %v40 = vld [vmem:[%s1 + $0xc] sm:$0xf]
  %v41 = vld [vmem:[%s1 + $0x10] sm:$0xf]
  %v42 = vld [vmem:[%s1 + $0x14] sm:$0xf]
  %v43 = vld [vmem:[%s2] sm:$0x1]
  %v45 = vlaneseq
  %v46 = vshrl.u32 %v45, 7
  %v47 = vsub.s32 0, %v46
  %v48 = vrot.slane %v43, %v47
  %v66 = vunpack.c.l.b16 %v21
  %v67 = vunpack.c.l.b16 %v22
  %v68 = vunpack.c.l.b16 %v23
  %v69 = vunpack.c.l.b16 %v24
  %v70 = vunpack.c.l.b16 %v25
  %v71 = vunpack.c.l.b16 %v26
  %v72 = vunpack.c.l.b16 %v27
  %v73 = vunpack.c.l.b16 %v28
  %v74 = vunpack.c.l.b16 %v29
  %v75 = vunpack.c.l.b16 %v30
  %v76 = vunpack.c.l.b16 %v31
  %v77 = vunpack.c.l.b16 %v32
  %v78 = vunpack.c.l.b16 %v33
  %v79 = vunpack.c.l.b16 %v34
  %v80 = vunpack.c.l.b16 %v35
  %v81 = vunpack.c.l.b16 %v36
  %v82 = vpack.c.b16 %v67, %v66
  %v83 = vpack.c.b16 %v69, %v68
  %v84 = vpack.c.b16 %v71, %v70
  %v85 = vpack.c.b16 %v73, %v72
  %v86 = vpack.c.b16 %v75, %v74
  %v87 = vpack.c.b16 %v77, %v76
  %v88 = vpack.c.b16 %v79, %v78
  %v89 = vpack.c.b16 %v81, %v80
  %v96 = vunpack.c.l.b16 %v37
  %v97 = vunpack.c.l.b16 %v38
  %v98 = vunpack.c.l.b16 %v39
  %v99 = vunpack.c.l.b16 %v40
  %v100 = vunpack.c.l.b16 %v41
  %v101 = vunpack.c.l.b16 %v42
  %v102 = vpack.c.b16 %v97, %v96
  %v103 = vpack.c.b16 %v99, %v98
  %v104 = vpack.c.b16 %v101, %v100
  %vm108 = vcmask 392192
  %v110 = vsel %vm108, %v82, 0
  %v113 = vsel %vm108, %v83, 0
  %v116 = vsel %vm108, %v84, 0
  %v119 = vsel %vm108, %v85, 0
  %v122 = vsel %vm108, %v86, 0
  %v125 = vsel %vm108, %v87, 0
  %v128 = vsel %vm108, %v88, 0
  %v131 = vsel %vm108, %v89, 0
  %133 = vmatprep.subr.bf16.mxu0 0
  %134 = vmatpush1.bf16.msra.mxu0 0
  %135 = vmatprep.subr.bf16.mxu0 0
  %136 = vmatpush1.bf16.msra.mxu0 0
  %137 = vmatprep.subr.bf16.mxu0 0
  %138 = vmatpush1.bf16.msra.mxu0 0
  %139 = vmatprep.subr.bf16.mxu0 0
  %140 = vmatpush1.bf16.msra.mxu0 0
  %141 = vmatprep.subr.bf16.mxu0 0
  %142 = vmatpush1.bf16.msra.mxu0 0
  %143 = vmatprep.subr.bf16.mxu0 0
  %144 = vmatpush1.bf16.msra.mxu0 %v104
  %145 = vmatprep.subr.bf16.mxu0 0
  %146 = vmatpush1.bf16.msra.mxu0 %v103
  %147 = vmatprep.subr.bf16.mxu0 0
  %148 = vmatpush1.bf16.msra.mxu0 %v102
  %149 = vmatprep.subr.bf16.mxu0 0
  %150 = vmatpush2.bf16.msra.mxu0 0
  %151 = vmatprep.subr.bf16.mxu0 0
  %152 = vmatpush2.bf16.msra.mxu0 0
  %153 = vmatprep.subr.bf16.mxu0 0
  %154 = vmatpush2.bf16.msra.mxu0 0
  %155 = vmatprep.subr.bf16.mxu0 0
  %156 = vmatpush2.bf16.msra.mxu0 0
  %157 = vmatprep.subr.bf16.mxu0 0
  %158 = vmatpush2.bf16.msra.mxu0 0
  %159 = vmatprep.subr.bf16.mxu0 0
  %160 = vmatpush2.bf16.msra.mxu0 0
  %161 = vmatprep.subr.bf16.mxu0 0
  %162 = vmatpush2.bf16.msra.mxu0 0
  %163 = vmatprep.subr.bf16.mxu0 0
  %164 = vmatpush2.bf16.msra.mxu0 0
  %165 = vmatprep.mubr.bf16.mxu0 0
  %166 = vmatmul.mubr.bf16.gmra.mxu0 %v110
  %v167 = vpop.f32.mrf.mxu0
  %v168 = vadd.f32 %v48, %v167
  %v169 = vpop.f32.mrf.mxu0
  %v170 = vpop.f32.mrf.mxu0
  %v171 = vadd.f32 %v48, %v170
  %v172 = vpop.f32.mrf.mxu0
  %173 = vmatprep.mubr.bf16.mxu0 0
  %174 = vmatmul.mubr.bf16.gmra.mxu0 %v113
  %v175 = vpop.f32.mrf.mxu0
  %v176 = vadd.f32 %v48, %v175
  %v177 = vpop.f32.mrf.mxu0
  %v178 = vpop.f32.mrf.mxu0
  %v179 = vadd.f32 %v48, %v178
  %v180 = vpop.f32.mrf.mxu0
  %181 = vmatprep.mubr.bf16.mxu0 0
  %182 = vmatmul.mubr.bf16.gmra.mxu0 %v116
  %v183 = vpop.f32.mrf.mxu0
  %v184 = vadd.f32 %v48, %v183
  %v185 = vpop.f32.mrf.mxu0
  %v186 = vpop.f32.mrf.mxu0
  %v187 = vadd.f32 %v48, %v186
  %v188 = vpop.f32.mrf.mxu0
  %189 = vmatprep.mubr.bf16.mxu0 0
  %190 = vmatmul.mubr.bf16.gmra.mxu0 %v119
  %v191 = vpop.f32.mrf.mxu0
  %v192 = vadd.f32 %v48, %v191
  %v193 = vpop.f32.mrf.mxu0
  %v194 = vpop.f32.mrf.mxu0
  %v195 = vadd.f32 %v48, %v194
  %v196 = vpop.f32.mrf.mxu0
  %197 = vmatprep.mubr.bf16.mxu0 0
  %198 = vmatmul.mubr.bf16.gmra.mxu0 %v122
  %v199 = vpop.f32.mrf.mxu0
  %v200 = vadd.f32 %v48, %v199
  %v201 = vpop.f32.mrf.mxu0
  %v202 = vpop.f32.mrf.mxu0
  %v203 = vadd.f32 %v48, %v202
  %v204 = vpop.f32.mrf.mxu0
  %205 = vmatprep.mubr.bf16.mxu0 0
  %206 = vmatmul.mubr.bf16.gmra.mxu0 %v125
  %v207 = vpop.f32.mrf.mxu0
  %v208 = vadd.f32 %v48, %v207
  %v209 = vpop.f32.mrf.mxu0
  %v210 = vpop.f32.mrf.mxu0
  %v211 = vadd.f32 %v48, %v210
  %v212 = vpop.f32.mrf.mxu0
  %213 = vmatprep.mubr.bf16.mxu0 0
  %214 = vmatmul.mubr.bf16.gmra.mxu0 %v128
  %v215 = vpop.f32.mrf.mxu0
  %v216 = vadd.f32 %v48, %v215
  %v217 = vpop.f32.mrf.mxu0
  %v218 = vpop.f32.mrf.mxu0
  %v219 = vadd.f32 %v48, %v218
  %v220 = vpop.f32.mrf.mxu0
  %221 = vmatprep.mubr.bf16.mxu0 0
  %222 = vmatmul.mubr.bf16.gmra.mxu0 %v131
  %v223 = vpop.f32.mrf.mxu0
  %v224 = vadd.f32 %v48, %v223
  %v225 = vpop.f32.mrf.mxu0
  %v226 = vpop.f32.mrf.mxu0
  %v227 = vadd.f32 %v48, %v226
  %v228 = vpop.f32.mrf.mxu0
  %229 = vdwg.mxu0
  %vm230 = vcmask 261120
  %v231 = vsel %vm230, %v168, 0.0
  %232 = vadd.xlane.f32.xlu0 %v231
  %v233 = vpop.xlane.xlu0 %232
  %v234 = vsel %vm230, %v171, 0.0
  %235 = vadd.xlane.f32.xlu0 %v234
  %v236 = vpop.xlane.xlu0 %235
  %v237 = vsel %vm230, %v176, 0.0
  %238 = vadd.xlane.f32.xlu0 %v237
  %v239 = vpop.xlane.xlu0 %238
  %v240 = vsel %vm230, %v179, 0.0
  %241 = vadd.xlane.f32.xlu0 %v240
  %v242 = vpop.xlane.xlu0 %241
  %v243 = vsel %vm230, %v184, 0.0
  %244 = vadd.xlane.f32.xlu0 %v243
  %v245 = vpop.xlane.xlu0 %244
  %v246 = vsel %vm230, %v187, 0.0
  %247 = vadd.xlane.f32.xlu0 %v246
  %v248 = vpop.xlane.xlu0 %247
  %v249 = vsel %vm230, %v192, 0.0
  %250 = vadd.xlane.f32.xlu0 %v249
  %v251 = vpop.xlane.xlu0 %250
  %v252 = vsel %vm230, %v195, 0.0
  %253 = vadd.xlane.f32.xlu0 %v252
  %v254 = vpop.xlane.xlu0 %253
  %v255 = vsel %vm230, %v200, 0.0
  %256 = vadd.xlane.f32.xlu0 %v255
  %v257 = vpop.xlane.xlu0 %256
  %v258 = vsel %vm230, %v203, 0.0
  %259 = vadd.xlane.f32.xlu0 %v258
  %v260 = vpop.xlane.xlu0 %259
  %v261 = vsel %vm230, %v208, 0.0
  %262 = vadd.xlane.f32.xlu0 %v261
  %v263 = vpop.xlane.xlu0 %262
  %v264 = vsel %vm230, %v211, 0.0
  %265 = vadd.xlane.f32.xlu0 %v264
  %v266 = vpop.xlane.xlu0 %265
  %v267 = vsel %vm230, %v216, 0.0
  %268 = vadd.xlane.f32.xlu0 %v267
  %v269 = vpop.xlane.xlu0 %268
  %v270 = vsel %vm230, %v219, 0.0
  %271 = vadd.xlane.f32.xlu0 %v270
  %v272 = vpop.xlane.xlu0 %271
  %v273 = vsel %vm230, %v224, 0.0
  %274 = vadd.xlane.f32.xlu0 %v273
  %v275 = vpop.xlane.xlu0 %274
  %v276 = vsel %vm230, %v227, 0.0
  %277 = vadd.xlane.f32.xlu0 %v276
  %v278 = vpop.xlane.xlu0 %277
  %v279 = vrcp.pop 32.0
  %v280 = vmul.f32 %v233, %v279
  %v281 = vmul.f32 %v236, %v279
  %v282 = vmul.f32 %v239, %v279
  %v283 = vmul.f32 %v242, %v279
  %v284 = vmul.f32 %v245, %v279
  %v285 = vmul.f32 %v248, %v279
  %v286 = vmul.f32 %v251, %v279
  %v287 = vmul.f32 %v254, %v279
  %v288 = vmul.f32 %v257, %v279
  %v289 = vmul.f32 %v260, %v279
  %v290 = vmul.f32 %v263, %v279
  %v291 = vmul.f32 %v266, %v279
  %v292 = vmul.f32 %v269, %v279
  %v293 = vmul.f32 %v272, %v279
  %v294 = vmul.f32 %v275, %v279
  %v295 = vmul.f32 %v278, %v279
  %v296 = vmul.f32 %v168, %v168
  %v297 = vmul.f32 %v171, %v171
  %v298 = vmul.f32 %v176, %v176
  %v299 = vmul.f32 %v179, %v179
  %v300 = vmul.f32 %v184, %v184
  %v301 = vmul.f32 %v187, %v187
  %v302 = vmul.f32 %v192, %v192
  %v303 = vmul.f32 %v195, %v195
  %v304 = vmul.f32 %v200, %v200
  %v305 = vmul.f32 %v203, %v203
  %v306 = vmul.f32 %v208, %v208
  %v307 = vmul.f32 %v211, %v211
  %v308 = vmul.f32 %v216, %v216
  %v309 = vmul.f32 %v219, %v219
  %v310 = vmul.f32 %v224, %v224
  %v311 = vmul.f32 %v227, %v227
  %v312 = vsel %vm230, %v296, 0.0
  %313 = vadd.xlane.f32.xlu0 %v312
  %v314 = vpop.xlane.xlu0 %313
  %v315 = vsel %vm230, %v297, 0.0
  %316 = vadd.xlane.f32.xlu0 %v315
  %v317 = vpop.xlane.xlu0 %316
  %v318 = vsel %vm230, %v298, 0.0
  %319 = vadd.xlane.f32.xlu0 %v318
  %v320 = vpop.xlane.xlu0 %319
  %v321 = vsel %vm230, %v299, 0.0
  %322 = vadd.xlane.f32.xlu0 %v321
  %v323 = vpop.xlane.xlu0 %322
  %v324 = vsel %vm230, %v300, 0.0
  %325 = vadd.xlane.f32.xlu0 %v324
  %v326 = vpop.xlane.xlu0 %325
  %v327 = vsel %vm230, %v301, 0.0
  %328 = vadd.xlane.f32.xlu0 %v327
  %v329 = vpop.xlane.xlu0 %328
  %v330 = vsel %vm230, %v302, 0.0
  %331 = vadd.xlane.f32.xlu0 %v330
  %v332 = vpop.xlane.xlu0 %331
  %v333 = vsel %vm230, %v303, 0.0
  %334 = vadd.xlane.f32.xlu0 %v333
  %v335 = vpop.xlane.xlu0 %334
  %v336 = vsel %vm230, %v304, 0.0
  %337 = vadd.xlane.f32.xlu0 %v336
  %v338 = vpop.xlane.xlu0 %337
  %v339 = vsel %vm230, %v305, 0.0
  %340 = vadd.xlane.f32.xlu0 %v339
  %v341 = vpop.xlane.xlu0 %340
  %v342 = vsel %vm230, %v306, 0.0
  %343 = vadd.xlane.f32.xlu0 %v342
  %v344 = vpop.xlane.xlu0 %343
  %v345 = vsel %vm230, %v307, 0.0
  %346 = vadd.xlane.f32.xlu0 %v345
  %v347 = vpop.xlane.xlu0 %346
  %v348 = vsel %vm230, %v308, 0.0
  %349 = vadd.xlane.f32.xlu0 %v348
  %v350 = vpop.xlane.xlu0 %349
  %v351 = vsel %vm230, %v309, 0.0
  %352 = vadd.xlane.f32.xlu0 %v351
  %v353 = vpop.xlane.xlu0 %352
  %v354 = vsel %vm230, %v310, 0.0
  %355 = vadd.xlane.f32.xlu0 %v354
  %v356 = vpop.xlane.xlu0 %355
  %v357 = vsel %vm230, %v311, 0.0
  %358 = vadd.xlane.f32.xlu0 %v357
  %v359 = vpop.xlane.xlu0 %358
  %v360 = vmul.f32 %v314, %v279
  %v361 = vmul.f32 %v317, %v279
  %v362 = vmul.f32 %v320, %v279
  %v363 = vmul.f32 %v323, %v279
  %v364 = vmul.f32 %v326, %v279
  %v365 = vmul.f32 %v329, %v279
  %v366 = vmul.f32 %v332, %v279
  %v367 = vmul.f32 %v335, %v279
  %v368 = vmul.f32 %v338, %v279
  %v369 = vmul.f32 %v341, %v279
  %v370 = vmul.f32 %v344, %v279
  %v371 = vmul.f32 %v347, %v279
  %v372 = vmul.f32 %v350, %v279
  %v373 = vmul.f32 %v353, %v279
  %v374 = vmul.f32 %v356, %v279
  %v375 = vmul.f32 %v359, %v279
  %v376 = vmul.f32 %v280, %v280
  %v377 = vmul.f32 %v281, %v281
  %v378 = vmul.f32 %v282, %v282
  %v379 = vmul.f32 %v283, %v283
  %v380 = vmul.f32 %v284, %v284
  %v381 = vmul.f32 %v285, %v285
  %v382 = vmul.f32 %v286, %v286
  %v383 = vmul.f32 %v287, %v287
  %v384 = vmul.f32 %v288, %v288
  %v385 = vmul.f32 %v289, %v289
  %v386 = vmul.f32 %v290, %v290
  %v387 = vmul.f32 %v291, %v291
  %v388 = vmul.f32 %v292, %v292
  %v389 = vmul.f32 %v293, %v293
  %v390 = vmul.f32 %v294, %v294
  %v391 = vmul.f32 %v295, %v295
  %v392 = vsub.f32 %v360, %v376
  %v393 = vsub.f32 %v361, %v377
  %v394 = vsub.f32 %v362, %v378
  %v395 = vsub.f32 %v363, %v379
  %v396 = vsub.f32 %v364, %v380
  %v397 = vsub.f32 %v365, %v381
  %v398 = vsub.f32 %v366, %v382
  %v399 = vsub.f32 %v367, %v383
  %v400 = vsub.f32 %v368, %v384
  %v401 = vsub.f32 %v369, %v385
  %v402 = vsub.f32 %v370, %v386
  %v403 = vsub.f32 %v371, %v387
  %v404 = vsub.f32 %v372, %v388
  %v405 = vsub.f32 %v373, %v389
  %v406 = vsub.f32 %v374, %v390
  %v407 = vsub.f32 %v375, %v391
  %v408 = vmax.f32 %v392, 0.0
  %v409 = vmax.f32 %v393, 0.0
  %v410 = vmax.f32 %v394, 0.0
  %v411 = vmax.f32 %v395, 0.0
  %v412 = vmax.f32 %v396, 0.0
  %v413 = vmax.f32 %v397, 0.0
  %v414 = vmax.f32 %v398, 0.0
  %v415 = vmax.f32 %v399, 0.0
  %v416 = vmax.f32 %v400, 0.0
  %v417 = vmax.f32 %v401, 0.0
  %v418 = vmax.f32 %v402, 0.0
  %v419 = vmax.f32 %v403, 0.0
  %v420 = vmax.f32 %v404, 0.0
  %v421 = vmax.f32 %v405, 0.0
  %v422 = vmax.f32 %v406, 0.0
  %v423 = vmax.f32 %v407, 0.0
  %v424 = vsub.f32 %v168, %v280
  %v425 = vsub.f32 %v171, %v281
  %v426 = vsub.f32 %v176, %v282
  %v427 = vsub.f32 %v179, %v283
  %v428 = vsub.f32 %v184, %v284
  %v429 = vsub.f32 %v187, %v285
  %v430 = vsub.f32 %v192, %v286
  %v431 = vsub.f32 %v195, %v287
  %v432 = vsub.f32 %v200, %v288
  %v433 = vsub.f32 %v203, %v289
  %v434 = vsub.f32 %v208, %v290
  %v435 = vsub.f32 %v211, %v291
  %v436 = vsub.f32 %v216, %v292
  %v437 = vsub.f32 %v219, %v293
  %v438 = vsub.f32 %v224, %v294
  %v439 = vsub.f32 %v227, %v295
  %v440 = vadd.f32 %v408, 1e-05
  %v441 = vadd.f32 %v409, 1e-05
  %v442 = vadd.f32 %v410, 1e-05
  %v443 = vadd.f32 %v411, 1e-05
  %v444 = vadd.f32 %v412, 1e-05
  %v445 = vadd.f32 %v413, 1e-05
  %v446 = vadd.f32 %v414, 1e-05
  %v447 = vadd.f32 %v415, 1e-05
  %v448 = vadd.f32 %v416, 1e-05
  %v449 = vadd.f32 %v417, 1e-05
  %v450 = vadd.f32 %v418, 1e-05
  %v451 = vadd.f32 %v419, 1e-05
  %v452 = vadd.f32 %v420, 1e-05
  %v453 = vadd.f32 %v421, 1e-05
  %v454 = vadd.f32 %v422, 1e-05
  %v455 = vadd.f32 %v423, 1e-05
  %v456 = vrsqrt.pop %v440
  %v457 = vrsqrt.pop %v441
  %v458 = vrsqrt.pop %v442
  %v459 = vrsqrt.pop %v443
  %v460 = vrsqrt.pop %v444
  %v461 = vrsqrt.pop %v445
  %v462 = vrsqrt.pop %v446
  %v463 = vrsqrt.pop %v447
  %v464 = vrsqrt.pop %v448
  %v465 = vrsqrt.pop %v449
  %v466 = vrsqrt.pop %v450
  %v467 = vrsqrt.pop %v451
  %v468 = vrsqrt.pop %v452
  %v469 = vrsqrt.pop %v453
  %v470 = vrsqrt.pop %v454
  %v471 = vrsqrt.pop %v455
  %v472 = vmul.f32 %v424, %v456
  %v473 = vmul.f32 %v425, %v457
  %v474 = vmul.f32 %v426, %v458
  %v475 = vmul.f32 %v427, %v459
  %v476 = vmul.f32 %v428, %v460
  %v477 = vmul.f32 %v429, %v461
  %v478 = vmul.f32 %v430, %v462
  %v479 = vmul.f32 %v431, %v463
  %v480 = vmul.f32 %v432, %v464
  %v481 = vmul.f32 %v433, %v465
  %v482 = vmul.f32 %v434, %v466
  %v483 = vmul.f32 %v435, %v467
  %v484 = vmul.f32 %v436, %v468
  %v485 = vmul.f32 %v437, %v469
  %v486 = vmul.f32 %v438, %v470
  %v487 = vmul.f32 %v439, %v471
  %v488 = vld [vmem:[%s3] sm:$0x1]
  %v490 = vlaneseq
  %v491 = vshrl.u32 %v490, 7
  %v492 = vsub.s32 0, %v491
  %v493 = vrot.slane %v488, %v492
  %v495 = vmul.f32 %v472, %v493
  %v496 = vmul.f32 %v473, %v493
  %v497 = vmul.f32 %v474, %v493
  %v498 = vmul.f32 %v475, %v493
  %v499 = vmul.f32 %v476, %v493
  %v500 = vmul.f32 %v477, %v493
  %v501 = vmul.f32 %v478, %v493
  %v502 = vmul.f32 %v479, %v493
  %v503 = vmul.f32 %v480, %v493
  %v504 = vmul.f32 %v481, %v493
  %v505 = vmul.f32 %v482, %v493
  %v506 = vmul.f32 %v483, %v493
  %v507 = vmul.f32 %v484, %v493
  %v508 = vmul.f32 %v485, %v493
  %v509 = vmul.f32 %v486, %v493
  %v510 = vmul.f32 %v487, %v493
  %v511 = vld [vmem:[%s4] sm:$0x1]
  %v513 = vlaneseq
  %v514 = vshrl.u32 %v513, 7
  %v515 = vsub.s32 0, %v514
  %v516 = vrot.slane %v511, %v515
  %v518 = vadd.f32 %v495, %v516
  %v519 = vadd.f32 %v496, %v516
  %v520 = vadd.f32 %v497, %v516
  %v521 = vadd.f32 %v498, %v516
  %v522 = vadd.f32 %v499, %v516
  %v523 = vadd.f32 %v500, %v516
  %v524 = vadd.f32 %v501, %v516
  %v525 = vadd.f32 %v502, %v516
  %v526 = vadd.f32 %v503, %v516
  %v527 = vadd.f32 %v504, %v516
  %v528 = vadd.f32 %v505, %v516
  %v529 = vadd.f32 %v506, %v516
  %v530 = vadd.f32 %v507, %v516
  %v531 = vadd.f32 %v508, %v516
  %v532 = vadd.f32 %v509, %v516
  %v533 = vadd.f32 %v510, %v516
  %v534 = vpack.c.bf16 %v519, %v518
  %v535 = vpack.c.bf16 %v521, %v520
  %v536 = vpack.c.bf16 %v523, %v522
  %v537 = vpack.c.bf16 %v525, %v524
  %v538 = vpack.c.bf16 %v527, %v526
  %v539 = vpack.c.bf16 %v529, %v528
  %v540 = vpack.c.bf16 %v531, %v530
  %v541 = vpack.c.bf16 %v533, %v532
  %v550 = vunpack.c.l.b16 %v534
  %v551 = vunpack.c.h.b16 %v534
  %v552 = vunpack.c.l.b16 %v535
  %v553 = vunpack.c.h.b16 %v535
  %v554 = vunpack.c.l.b16 %v536
  %v555 = vunpack.c.h.b16 %v536
  %v556 = vunpack.c.l.b16 %v537
  %v557 = vunpack.c.h.b16 %v537
  %v558 = vunpack.c.l.b16 %v538
  %v559 = vunpack.c.h.b16 %v538
  %v560 = vunpack.c.l.b16 %v539
  %v561 = vunpack.c.h.b16 %v539
  %v562 = vunpack.c.l.b16 %v540
  %v563 = vunpack.c.h.b16 %v540
  %v564 = vunpack.c.l.b16 %v541
  %v565 = vunpack.c.h.b16 %v541
  %v566 = vpack.c.b16 %v550, %v550
  %v567 = vpack.c.b16 %v551, %v551
  %v568 = vpack.c.b16 %v552, %v552
  %v569 = vpack.c.b16 %v553, %v553
  %v570 = vpack.c.b16 %v554, %v554
  %v571 = vpack.c.b16 %v555, %v555
  %v572 = vpack.c.b16 %v556, %v556
  %v573 = vpack.c.b16 %v557, %v557
  %v574 = vpack.c.b16 %v558, %v558
  %v575 = vpack.c.b16 %v559, %v559
  %v576 = vpack.c.b16 %v560, %v560
  %v577 = vpack.c.b16 %v561, %v561
  %v578 = vpack.c.b16 %v562, %v562
  %v579 = vpack.c.b16 %v563, %v563
  %v580 = vpack.c.b16 %v564, %v564
  %v581 = vpack.c.b16 %v565, %v565
  %vm598 = vcmask 257024
  %599 = vst.msk [vmem:[%s5] sm:$0xf] %vm598, %v566
  %600 = vst.msk [vmem:[%s5 + $0x4] sm:$0xf] %vm598, %v567
  %601 = vst.msk [vmem:[%s5 + $0x8] sm:$0xf] %vm598, %v568
  %602 = vst.msk [vmem:[%s5 + $0xc] sm:$0xf] %vm598, %v569
  %603 = vst.msk [vmem:[%s5 + $0x10] sm:$0xf] %vm598, %v570
  %604 = vst.msk [vmem:[%s5 + $0x14] sm:$0xf] %vm598, %v571
  %605 = vst.msk [vmem:[%s5 + $0x18] sm:$0xf] %vm598, %v572
  %606 = vst.msk [vmem:[%s5 + $0x1c] sm:$0xf] %vm598, %v573
  %607 = vst.msk [vmem:[%s5 + $0x20] sm:$0xf] %vm598, %v574
  %608 = vst.msk [vmem:[%s5 + $0x24] sm:$0xf] %vm598, %v575
  %609 = vst.msk [vmem:[%s5 + $0x28] sm:$0xf] %vm598, %v576
  %610 = vst.msk [vmem:[%s5 + $0x2c] sm:$0xf] %vm598, %v577
  %611 = vst.msk [vmem:[%s5 + $0x30] sm:$0xf] %vm598, %v578
  %612 = vst.msk [vmem:[%s5 + $0x34] sm:$0xf] %vm598, %v579
  %613 = vst.msk [vmem:[%s5 + $0x38] sm:$0xf] %vm598, %v580
  %614 = vst.msk [vmem:[%s5 + $0x3c] sm:$0xf] %vm598, %v581
  // Predicated region
  $region22: #{vssm_forward.4} parent=0 // pred_check
    _
  $region23: #{vssm_forward.4} parent=0 // pred_check_branch
    %616 = sbr.rel (0) target = $region25
  $region24: #{vssm_forward.4} parent=0 // pred_region
    _
  $region25: #{vssm_forward.4} parent=0 // pred_fallthru
    _
  // Predicated region
  $region26: #{vssm_forward.4} parent=0 // pred_check
    _
  $region27: #{vssm_forward.4} parent=0 // pred_check_branch
    %618 = sbr.rel (0) target = $region29
  $region28: #{vssm_forward.4} parent=0 // pred_region
    _
  $region29: #{vssm_forward.4} parent=0 // pred_fallthru
    _

// kernel: vssm_forward.5
$region0: #{vssm_forward.5}
  #allocation0 [shape = 'u32[]', space=smem, size = 0x4, offset = 0x4, fixed_abs, tag = 'smem constant byte address 0x4 - core index']
  #allocation1 [shape = 'u32[144,128]{1,0:T(1,128)}', space=vmem, size = 0x12000, scoped, tag = 'internal scratch']
  %s0 = inlined_call_operand.vmem [shape: bf16[32,128], index: 0, kind: input, shape index: {}]
  %s1 = inlined_call_operand.vmem [shape: f32[1,128], index: 1, kind: input, shape index: {}]
  %s2 = inlined_call_operand.vmem [shape: f32[1,128], index: 2, kind: input, shape index: {}]
  %s3 = inlined_call_operand.vmem [shape: bf16[128,64], index: 3, kind: input, shape index: {}]
  %s4 = inlined_call_operand.vmem [shape: bf16[32,64], index: 4, kind: output, shape index: {}]
  %s5 = sld [smem:[#allocation0]]
  $region26: #{vssm_forward.5} parent=0
    _
  %s7 = ssub.s32 1, %s5
  %s8 = scalar_select 0, %s7, %s5
  // Predicated region
  $region2: #{vssm_forward.5} parent=0 // pred_check
    _
  $region3: #{vssm_forward.5} parent=0 // pred_check_branch
    %10 = sbr.rel (0) target = $region5
  $region4: #{vssm_forward.5} parent=0 // pred_region
    _
  $region5: #{vssm_forward.5} parent=0 // pred_fallthru
    _
  // Predicated region
  $region6: #{vssm_forward.5} parent=0 // pred_check
    _
  $region7: #{vssm_forward.5} parent=0 // pred_check_branch
    %12 = sbr.rel (0) target = $region9
  $region8: #{vssm_forward.5} parent=0 // pred_region
    _
  $region9: #{vssm_forward.5} parent=0 // pred_fallthru
    _
  // Predicated region
  $region10: #{vssm_forward.5} parent=0 // pred_check
    _
  $region11: #{vssm_forward.5} parent=0 // pred_check_branch
    %14 = sbr.rel (0) target = $region13
  $region12: #{vssm_forward.5} parent=0 // pred_region
    _
  $region13: #{vssm_forward.5} parent=0 // pred_fallthru
    _
  // Predicated region
  $region14: #{vssm_forward.5} parent=0 // pred_check
    _
  $region15: #{vssm_forward.5} parent=0 // pred_check_branch
    %16 = sbr.rel (0) target = $region17
  $region16: #{vssm_forward.5} parent=0 // pred_region
    _
  $region17: #{vssm_forward.5} parent=0 // pred_fallthru
    _
  %v18 = vld [vmem:[%s0] sm:$0xf]
  %v19 = vld [vmem:[%s0 + $0x4] sm:$0xf]
  %v20 = vld [vmem:[%s0 + $0x8] sm:$0xf]
  %v21 = vld [vmem:[%s0 + $0xc] sm:$0xf]
  %v22 = vunpack.c.l.bf16 %v18
  %v23 = vunpack.c.l.bf16 %v19
  %v24 = vunpack.c.l.bf16 %v20
  %v25 = vunpack.c.l.bf16 %v21
  %26 = vadd.xlane.f32.xlu0 %v22
  %v27 = vpop.xlane.xlu0 %26
  %28 = vadd.xlane.f32.xlu0 %v23
  %v29 = vpop.xlane.xlu0 %28
  %30 = vadd.xlane.f32.xlu0 %v24
  %v31 = vpop.xlane.xlu0 %30
  %32 = vadd.xlane.f32.xlu0 %v25
  %v33 = vpop.xlane.xlu0 %32
  %v34 = vrcp.pop 128.0
  %v35 = vmul.f32 %v27, %v34
  %v36 = vmul.f32 %v29, %v34
  %v37 = vmul.f32 %v31, %v34
  %v38 = vmul.f32 %v33, %v34
  %v39 = vmul.f32 %v22, %v22
  %v40 = vmul.f32 %v23, %v23
  %v41 = vmul.f32 %v24, %v24
  %v42 = vmul.f32 %v25, %v25
  %43 = vadd.xlane.f32.xlu0 %v39
  %v44 = vpop.xlane.xlu0 %43
  %45 = vadd.xlane.f32.xlu0 %v40
  %v46 = vpop.xlane.xlu0 %45
  %47 = vadd.xlane.f32.xlu0 %v41
  %v48 = vpop.xlane.xlu0 %47
  %49 = vadd.xlane.f32.xlu0 %v42
  %v50 = vpop.xlane.xlu0 %49
  %v51 = vmul.f32 %v44, %v34
  %v52 = vmul.f32 %v46, %v34
  %v53 = vmul.f32 %v48, %v34
  %v54 = vmul.f32 %v50, %v34
  %v55 = vmul.f32 %v35, %v35
  %v56 = vmul.f32 %v36, %v36
  %v57 = vmul.f32 %v37, %v37
  %v58 = vmul.f32 %v38, %v38
  %v59 = vsub.f32 %v51, %v55
  %v60 = vsub.f32 %v52, %v56
  %v61 = vsub.f32 %v53, %v57
  %v62 = vsub.f32 %v54, %v58
  %v63 = vmax.f32 %v59, 0.0
  %v64 = vmax.f32 %v60, 0.0
  %v65 = vmax.f32 %v61, 0.0
  %v66 = vmax.f32 %v62, 0.0
  %v67 = vsub.f32 %v22, %v35
  %v68 = vsub.f32 %v23, %v36
  %v69 = vsub.f32 %v24, %v37
  %v70 = vsub.f32 %v25, %v38
  %v71 = vadd.f32 %v63, 1e-05
  %v72 = vadd.f32 %v64, 1e-05
  %v73 = vadd.f32 %v65, 1e-05
  %v74 = vadd.f32 %v66, 1e-05
  %v75 = vrsqrt.pop %v71
  %v76 = vrsqrt.pop %v72
  %v77 = vrsqrt.pop %v73
  %v78 = vrsqrt.pop %v74
  %v79 = vmul.f32 %v67, %v75
  %v80 = vmul.f32 %v68, %v76
  %v81 = vmul.f32 %v69, %v77
  %v82 = vmul.f32 %v70, %v78
  %v83 = vld [vmem:[%s1] sm:$0x1]
  %v85 = vlaneseq
  %v86 = vshrl.u32 %v85, 7
  %v87 = vsub.s32 0, %v86
  %v88 = vrot.slane %v83, %v87
  %v90 = vmul.f32 %v79, %v88
  %v91 = vmul.f32 %v80, %v88
  %v92 = vmul.f32 %v81, %v88
  %v93 = vmul.f32 %v82, %v88
  %v94 = vld [vmem:[%s2] sm:$0x1]
  %v96 = vlaneseq
  %v97 = vshrl.u32 %v96, 7
  %v98 = vsub.s32 0, %v97
  %v99 = vrot.slane %v94, %v98
  %v101 = vadd.f32 %v90, %v99
  %v102 = vadd.f32 %v91, %v99
  %v103 = vadd.f32 %v92, %v99
  %v104 = vadd.f32 %v93, %v99
  %v105 = vpack.c.bf16 %v102, %v101
  %v106 = vpack.c.bf16 %v104, %v103
  %v107 = vld [vmem:[%s3] sm:$0xf]
  %v108 = vld [vmem:[%s3 + $0x4] sm:$0xf]
  %v109 = vld [vmem:[%s3 + $0x8] sm:$0xf]
  %v110 = vld [vmem:[%s3 + $0xc] sm:$0xf]
  %v111 = vld [vmem:[%s3 + $0x10] sm:$0xf]
  %v112 = vld [vmem:[%s3 + $0x14] sm:$0xf]
  %v113 = vld [vmem:[%s3 + $0x18] sm:$0xf]
  %v114 = vld [vmem:[%s3 + $0x1c] sm:$0xf]
  %v115 = vld [vmem:[%s3 + $0x20] sm:$0xf]
  %v116 = vld [vmem:[%s3 + $0x24] sm:$0xf]
  %v117 = vld [vmem:[%s3 + $0x28] sm:$0xf]
  %v118 = vld [vmem:[%s3 + $0x2c] sm:$0xf]
  %v119 = vld [vmem:[%s3 + $0x30] sm:$0xf]
  %v120 = vld [vmem:[%s3 + $0x34] sm:$0xf]
  %v121 = vld [vmem:[%s3 + $0x38] sm:$0xf]
  %v122 = vld [vmem:[%s3 + $0x3c] sm:$0xf]
  %v139 = vunpack.c.l.b16 %v107
  %v140 = vunpack.c.l.b16 %v108
  %v141 = vunpack.c.l.b16 %v109
  %v142 = vunpack.c.l.b16 %v110
  %v143 = vunpack.c.l.b16 %v111
  %v144 = vunpack.c.l.b16 %v112
  %v145 = vunpack.c.l.b16 %v113
  %v146 = vunpack.c.l.b16 %v114
  %v147 = vunpack.c.l.b16 %v115
  %v148 = vunpack.c.l.b16 %v116
  %v149 = vunpack.c.l.b16 %v117
  %v150 = vunpack.c.l.b16 %v118
  %v151 = vunpack.c.l.b16 %v119
  %v152 = vunpack.c.l.b16 %v120
  %v153 = vunpack.c.l.b16 %v121
  %v154 = vunpack.c.l.b16 %v122
  %v155 = vpack.c.b16 %v140, %v139
  %v156 = vpack.c.b16 %v142, %v141
  %v157 = vpack.c.b16 %v144, %v143
  %v158 = vpack.c.b16 %v146, %v145
  %v159 = vpack.c.b16 %v148, %v147
  %v160 = vpack.c.b16 %v150, %v149
  %v161 = vpack.c.b16 %v152, %v151
  %v162 = vpack.c.b16 %v154, %v153
  %171 = vmatprep.subr.bf16.mxu0 0
  %172 = vmatpush1.bf16.msra.mxu0 %v162
  %173 = vmatprep.subr.bf16.mxu0 0
  %174 = vmatpush1.bf16.msra.mxu0 %v161
  %175 = vmatprep.subr.bf16.mxu0 0
  %176 = vmatpush1.bf16.msra.mxu0 %v160
  %177 = vmatprep.subr.bf16.mxu0 0
  %178 = vmatpush1.bf16.msra.mxu0 %v159
  %179 = vmatprep.subr.bf16.mxu0 0
  %180 = vmatpush1.bf16.msra.mxu0 %v158
  %181 = vmatprep.subr.bf16.mxu0 0
  %182 = vmatpush1.bf16.msra.mxu0 %v157
  %183 = vmatprep.subr.bf16.mxu0 0
  %184 = vmatpush1.bf16.msra.mxu0 %v156
  %185 = vmatprep.subr.bf16.mxu0 0
  %186 = vmatpush1.bf16.msra.mxu0 %v155
  %187 = vmatprep.subr.bf16.mxu0 0
  %188 = vmatpush2.bf16.msra.mxu0 0
  %189 = vmatprep.subr.bf16.mxu0 0
  %190 = vmatpush2.bf16.msra.mxu0 0
  %191 = vmatprep.subr.bf16.mxu0 0
  %192 = vmatpush2.bf16.msra.mxu0 0
  %193 = vmatprep.subr.bf16.mxu0 0
  %194 = vmatpush2.bf16.msra.mxu0 0
  %195 = vmatprep.subr.bf16.mxu0 0
  %196 = vmatpush2.bf16.msra.mxu0 0
  %197 = vmatprep.subr.bf16.mxu0 0
  %198 = vmatpush2.bf16.msra.mxu0 0
  %199 = vmatprep.subr.bf16.mxu0 0
  %200 = vmatpush2.bf16.msra.mxu0 0
  %201 = vmatprep.subr.bf16.mxu0 0
  %202 = vmatpush2.bf16.msra.mxu0 0
  %203 = vmatprep.mubr.bf16.mxu0 0
  %204 = vmatmul.mubr.bf16.gmra.mxu0 %v105
  %v205 = vpop.f32.mrf.mxu0
  %v206 = vadd.f32 0.0, %v205
  %v207 = vpop.f32.mrf.mxu0
  %v208 = vpop.f32.mrf.mxu0
  %v209 = vadd.f32 0.0, %v208
  %v210 = vpop.f32.mrf.mxu0
  %211 = vmatprep.mubr.bf16.mxu0 0
  %212 = vmatmul.mubr.bf16.gmra.mxu0 %v106
  %v213 = vpop.f32.mrf.mxu0
  %v214 = vadd.f32 0.0, %v213
  %v215 = vpop.f32.mrf.mxu0
  %v216 = vpop.f32.mrf.mxu0
  %v217 = vadd.f32 0.0, %v216
  %v218 = vpop.f32.mrf.mxu0
  %219 = vdwg.mxu0
  %v220 = vpack.c.bf16 %v209, %v206
  %v221 = vpack.c.bf16 %v217, %v214
  %v224 = vunpack.c.l.b16 %v220
  %v225 = vunpack.c.h.b16 %v220
  %v226 = vunpack.c.l.b16 %v221
  %v227 = vunpack.c.h.b16 %v221
  %v228 = vpack.c.b16 %v224, %v224
  %v229 = vpack.c.b16 %v225, %v225
  %v230 = vpack.c.b16 %v226, %v226
  %v231 = vpack.c.b16 %v227, %v227
  %vm236 = vcmask 519168
  %237 = vst.msk [vmem:[%s4] sm:$0xf] %vm236, %v228
  %238 = vst.msk [vmem:[%s4 + $0x4] sm:$0xf] %vm236, %v229
  %239 = vst.msk [vmem:[%s4 + $0x8] sm:$0xf] %vm236, %v230
  %240 = vst.msk [vmem:[%s4 + $0xc] sm:$0xf] %vm236, %v231
  // Predicated region
  $region18: #{vssm_forward.5} parent=0 // pred_check
    _
  $region19: #{vssm_forward.5} parent=0 // pred_check_branch
    %242 = sbr.rel (0) target = $region21
  $region20: #{vssm_forward.5} parent=0 // pred_region
    _
  $region21: #{vssm_forward.5} parent=0 // pred_fallthru
    _
  // Predicated region
  $region22: #{vssm_forward.5} parent=0 // pred_check
    _
  $region23: #{vssm_forward.5} parent=0 // pred_check_branch
    %244 = sbr.rel (0) target = $region25
  $region24: #{vssm_forward.5} parent=0 // pred_region
    _
  $region25: #{vssm_forward.5} parent=0 // pred_fallthru
    _

// kernel: vssm_forward.6
$region0: #{vssm_forward.6}
  #allocation0 [shape = 'u32[]', space=smem, size = 0x4, offset = 0x4, fixed_abs, tag = 'smem constant byte address 0x4 - core index']
  #allocation1 [shape = 'u32[144,128]{1,0:T(1,128)}', space=vmem, size = 0x12000, scoped, tag = 'internal scratch']
  %s0 = inlined_call_operand.vmem [shape: bf16[8,256], index: 0, kind: input, shape index: {}]
  %s1 = inlined_call_operand.vmem [shape: f32[1,256], index: 1, kind: input, shape index: {}]
  %s2 = inlined_call_operand.vmem [shape: f32[1,256], index: 2, kind: input, shape index: {}]
  %s3 = inlined_call_operand.vmem [shape: bf16[256,128], index: 3, kind: input, shape index: {}]
  %s4 = inlined_call_operand.vmem [shape: bf16[8,128], index: 4, kind: output, shape index: {}]
  %s5 = sld [smem:[#allocation0]]
  $region26: #{vssm_forward.6} parent=0
    _
  %s7 = ssub.s32 1, %s5
  %s8 = scalar_select 0, %s7, %s5
  // Predicated region
  $region2: #{vssm_forward.6} parent=0 // pred_check
    _
  $region3: #{vssm_forward.6} parent=0 // pred_check_branch
    %10 = sbr.rel (0) target = $region5
  $region4: #{vssm_forward.6} parent=0 // pred_region
    _
  $region5: #{vssm_forward.6} parent=0 // pred_fallthru
    _
  // Predicated region
  $region6: #{vssm_forward.6} parent=0 // pred_check
    _
  $region7: #{vssm_forward.6} parent=0 // pred_check_branch
    %12 = sbr.rel (0) target = $region9
  $region8: #{vssm_forward.6} parent=0 // pred_region
    _
  $region9: #{vssm_forward.6} parent=0 // pred_fallthru
    _
  // Predicated region
  $region10: #{vssm_forward.6} parent=0 // pred_check
    _
  $region11: #{vssm_forward.6} parent=0 // pred_check_branch
    %14 = sbr.rel (0) target = $region13
  $region12: #{vssm_forward.6} parent=0 // pred_region
    _
  $region13: #{vssm_forward.6} parent=0 // pred_fallthru
    _
  // Predicated region
  $region14: #{vssm_forward.6} parent=0 // pred_check
    _
  $region15: #{vssm_forward.6} parent=0 // pred_check_branch
    %16 = sbr.rel (0) target = $region17
  $region16: #{vssm_forward.6} parent=0 // pred_region
    _
  $region17: #{vssm_forward.6} parent=0 // pred_fallthru
    _
  %v18 = vld [vmem:[%s0] sm:$0xff]
  %v19 = vunpack.c.l.bf16 %v18
  %v20 = vunpack.c.h.bf16 %v18
  %v21 = vadd.f32 %v19, %v20
  %22 = vadd.xlane.f32.xlu0 %v21
  %v23 = vpop.xlane.xlu0 %22
  %v24 = vrcp.pop 256.0
  %v25 = vmul.f32 %v23, %v24
  %v26 = vmul.f32 %v19, %v19
  %v27 = vmul.f32 %v20, %v20
  %v28 = vadd.f32 %v26, %v27
  %29 = vadd.xlane.f32.xlu0 %v28
  %v30 = vpop.xlane.xlu0 %29
  %v31 = vmul.f32 %v30, %v24
  %v32 = vmul.f32 %v25, %v25
  %v33 = vsub.f32 %v31, %v32
  %v34 = vmax.f32 %v33, 0.0
  %v35 = vsub.f32 %v19, %v25
  %v36 = vsub.f32 %v20, %v25
  %v37 = vadd.f32 %v34, 1e-05
  %v38 = vrsqrt.pop %v37
  %v39 = vmul.f32 %v35, %v38
  %v40 = vmul.f32 %v36, %v38
  %v41 = vld [vmem:[%s1] sm:$0x3]
  %v43 = vlaneseq
  %v44 = vshrl.u32 %v43, 7
  %v45 = vsub.s32 0, %v44
  %v46 = vrot.slane %v41, %v45
  %v47 = vlaneseq
  %v48 = vshrl.u32 %v47, 7
  %v49 = vsub.s32 1, %v48
  %v50 = vrot.slane %v41, %v49
  %v53 = vmul.f32 %v39, %v46
  %v54 = vmul.f32 %v40, %v50
  %v55 = vld [vmem:[%s2] sm:$0x3]
  %v57 = vlaneseq
  %v58 = vshrl.u32 %v57, 7
  %v59 = vsub.s32 0, %v58
  %v60 = vrot.slane %v55, %v59
  %v61 = vlaneseq
  %v62 = vshrl.u32 %v61, 7
  %v63 = vsub.s32 1, %v62
  %v64 = vrot.slane %v55, %v63
  %v67 = vadd.f32 %v53, %v60
  %v68 = vadd.f32 %v54, %v64
  %v69 = vpack.c.bf16 %v67, %v67
  %v70 = vpack.c.bf16 %v68, %v68
  %v71 = vld [vmem:[%s3] sm:$0xf]
  %v72 = vld [vmem:[%s3 + $0x4] sm:$0xf]
  %v73 = vld [vmem:[%s3 + $0x8] sm:$0xf]
  %v74 = vld [vmem:[%s3 + $0xc] sm:$0xf]
  %v75 = vld [vmem:[%s3 + $0x10] sm:$0xf]
  %v76 = vld [vmem:[%s3 + $0x14] sm:$0xf]
  %v77 = vld [vmem:[%s3 + $0x18] sm:$0xf]
  %v78 = vld [vmem:[%s3 + $0x1c] sm:$0xf]
  %v79 = vld [vmem:[%s3 + $0x20] sm:$0xf]
  %v80 = vld [vmem:[%s3 + $0x24] sm:$0xf]
  %v81 = vld [vmem:[%s3 + $0x28] sm:$0xf]
  %v82 = vld [vmem:[%s3 + $0x2c] sm:$0xf]
  %v83 = vld [vmem:[%s3 + $0x30] sm:$0xf]
  %v84 = vld [vmem:[%s3 + $0x34] sm:$0xf]
  %v85 = vld [vmem:[%s3 + $0x38] sm:$0xf]
  %v86 = vld [vmem:[%s3 + $0x3c] sm:$0xf]
  %v87 = vld [vmem:[%s3 + $0x40] sm:$0xf]
  %v88 = vld [vmem:[%s3 + $0x44] sm:$0xf]
  %v89 = vld [vmem:[%s3 + $0x48] sm:$0xf]
  %v90 = vld [vmem:[%s3 + $0x4c] sm:$0xf]
  %v91 = vld [vmem:[%s3 + $0x50] sm:$0xf]
  %v92 = vld [vmem:[%s3 + $0x54] sm:$0xf]
  %v93 = vld [vmem:[%s3 + $0x58] sm:$0xf]
  %v94 = vld [vmem:[%s3 + $0x5c] sm:$0xf]
  %v95 = vld [vmem:[%s3 + $0x60] sm:$0xf]
  %v96 = vld [vmem:[%s3 + $0x64] sm:$0xf]
  %v97 = vld [vmem:[%s3 + $0x68] sm:$0xf]
  %v98 = vld [vmem:[%s3 + $0x6c] sm:$0xf]
  %v99 = vld [vmem:[%s3 + $0x70] sm:$0xf]
  %v100 = vld [vmem:[%s3 + $0x74] sm:$0xf]
  %v101 = vld [vmem:[%s3 + $0x78] sm:$0xf]
  %v102 = vld [vmem:[%s3 + $0x7c] sm:$0xf]
  %v135 = vunpack.c.l.b16 %v71
  %v136 = vunpack.c.l.b16 %v72
  %v137 = vunpack.c.l.b16 %v73
  %v138 = vunpack.c.l.b16 %v74
  %v139 = vunpack.c.l.b16 %v75
  %v140 = vunpack.c.l.b16 %v76
  %v141 = vunpack.c.l.b16 %v77
  %v142 = vunpack.c.l.b16 %v78
  %v143 = vunpack.c.l.b16 %v79
  %v144 = vunpack.c.l.b16 %v80
  %v145 = vunpack.c.l.b16 %v81
  %v146 = vunpack.c.l.b16 %v82
  %v147 = vunpack.c.l.b16 %v83
  %v148 = vunpack.c.l.b16 %v84
  %v149 = vunpack.c.l.b16 %v85
  %v150 = vunpack.c.l.b16 %v86
  %v151 = vunpack.c.l.b16 %v87
  %v152 = vunpack.c.l.b16 %v88
  %v153 = vunpack.c.l.b16 %v89
  %v154 = vunpack.c.l.b16 %v90
  %v155 = vunpack.c.l.b16 %v91
  %v156 = vunpack.c.l.b16 %v92
  %v157 = vunpack.c.l.b16 %v93
  %v158 = vunpack.c.l.b16 %v94
  %v159 = vunpack.c.l.b16 %v95
  %v160 = vunpack.c.l.b16 %v96
  %v161 = vunpack.c.l.b16 %v97
  %v162 = vunpack.c.l.b16 %v98
  %v163 = vunpack.c.l.b16 %v99
  %v164 = vunpack.c.l.b16 %v100
  %v165 = vunpack.c.l.b16 %v101
  %v166 = vunpack.c.l.b16 %v102
  %v167 = vpack.c.b16 %v136, %v135
  %v168 = vpack.c.b16 %v138, %v137
  %v169 = vpack.c.b16 %v140, %v139
  %v170 = vpack.c.b16 %v142, %v141
  %v171 = vpack.c.b16 %v144, %v143
  %v172 = vpack.c.b16 %v146, %v145
  %v173 = vpack.c.b16 %v148, %v147
  %v174 = vpack.c.b16 %v150, %v149
  %v175 = vpack.c.b16 %v152, %v151
  %v176 = vpack.c.b16 %v154, %v153
  %v177 = vpack.c.b16 %v156, %v155
  %v178 = vpack.c.b16 %v158, %v157
  %v179 = vpack.c.b16 %v160, %v159
  %v180 = vpack.c.b16 %v162, %v161
  %v181 = vpack.c.b16 %v164, %v163
  %v182 = vpack.c.b16 %v166, %v165
  %199 = vmatprep.subr.bf16.mxu0 0
  %200 = vmatpush1.bf16.msra.mxu0 %v174
  %201 = vmatprep.subr.bf16.mxu0 0
  %202 = vmatpush1.bf16.msra.mxu0 %v173
  %203 = vmatprep.subr.bf16.mxu0 0
  %204 = vmatpush1.bf16.msra.mxu0 %v172
  %205 = vmatprep.subr.bf16.mxu0 0
  %206 = vmatpush1.bf16.msra.mxu0 %v171
  %207 = vmatprep.subr.bf16.mxu0 0
  %208 = vmatpush1.bf16.msra.mxu0 %v170
  %209 = vmatprep.subr.bf16.mxu0 0
  %210 = vmatpush1.bf16.msra.mxu0 %v169
  %211 = vmatprep.subr.bf16.mxu0 0
  %212 = vmatpush1.bf16.msra.mxu0 %v168
  %213 = vmatprep.subr.bf16.mxu0 0
  %214 = vmatpush1.bf16.msra.mxu0 %v167
  %215 = vmatprep.subr.bf16.mxu0 0
  %216 = vmatpush2.bf16.msra.mxu0 %v182
  %217 = vmatprep.subr.bf16.mxu0 0
  %218 = vmatpush2.bf16.msra.mxu0 %v181
  %219 = vmatprep.subr.bf16.mxu0 0
  %220 = vmatpush2.bf16.msra.mxu0 %v180
  %221 = vmatprep.subr.bf16.mxu0 0
  %222 = vmatpush2.bf16.msra.mxu0 %v179
  %223 = vmatprep.subr.bf16.mxu0 0
  %224 = vmatpush2.bf16.msra.mxu0 %v178
  %225 = vmatprep.subr.bf16.mxu0 0
  %226 = vmatpush2.bf16.msra.mxu0 %v177
  %227 = vmatprep.subr.bf16.mxu0 0
  %228 = vmatpush2.bf16.msra.mxu0 %v176
  %229 = vmatprep.subr.bf16.mxu0 0
  %230 = vmatpush2.bf16.msra.mxu0 %v175
  %231 = vmatprep.mubr.bf16.mxu0 %v70
  %232 = vmatmul.mubr.bf16.gmra.mxu0 %v69
  %v233 = vpop.f32.mrf.mxu0
  %v234 = vadd.f32 0.0, %v233
  %v235 = vpop.f32.mrf.mxu0
  %v236 = vpop.f32.mrf.mxu0
  %v237 = vpop.f32.mrf.mxu0
  %238 = vdwg.mxu0
  %v239 = vpack.c.bf16 %v234, %v234
  %240 = vst [vmem:[%s4] sm:$0xf] %v239
  // Predicated region
  $region18: #{vssm_forward.6} parent=0 // pred_check
    _
  $region19: #{vssm_forward.6} parent=0 // pred_check_branch
    %242 = sbr.rel (0) target = $region21
  $region20: #{vssm_forward.6} parent=0 // pred_region
    _
  $region21: #{vssm_forward.6} parent=0 // pred_fallthru
    _
  // Predicated region
  $region22: #{vssm_forward.6} parent=0 // pred_check
    _
  $region23: #{vssm_forward.6} parent=0 // pred_check_branch
    %244 = sbr.rel (0) target = $region25
  $region24: #{vssm_forward.6} parent=0 // pred_region
    _
  $region25: #{vssm_forward.6} parent=0 // pred_fallthru
    _

// kernel: vssm_forward.7
$region0: #{vssm_forward.7}
  #allocation0 [shape = 'u32[]', space=smem, size = 0x4, offset = 0x4, fixed_abs, tag = 'smem constant byte address 0x4 - core index']
  #allocation1 [shape = 'u32[144,128]{1,0:T(1,128)}', space=vmem, size = 0x12000, scoped, tag = 'internal scratch']
  %s0 = inlined_call_operand.vmem [shape: bf16[2,512], index: 0, kind: input, shape index: {}]
  %s1 = inlined_call_operand.vmem [shape: f32[1,512], index: 1, kind: input, shape index: {}]
  %s2 = inlined_call_operand.vmem [shape: f32[1,512], index: 2, kind: input, shape index: {}]
  %s3 = inlined_call_operand.vmem [shape: bf16[512,256], index: 3, kind: input, shape index: {}]
  %s4 = inlined_call_operand.hbm [shape: bf16[2,256], index: 4, kind: output, shape index: {}]
  %s5 = sld [smem:[#allocation0]]
  $region26: #{vssm_forward.7} parent=0
    _
  %s7 = ssub.s32 1, %s5
  %s8 = scalar_select 0, %s7, %s5
  $region1: #{vssm_forward.7} parent=0
    #allocation2 [shape = 'u8[1024]{0}', space=vmem, size = 0x400, scoped, tag = 'output window, operand 0, single buffered']
    #allocation3 [shape = 's32[1]{0}', space=sflag, size = 0x4, scoped, tag = 'scoped memory for vssm_forward.7']
    %9 = vsyncpa [#allocation3], 0
    // Predicated region
    $region2: #{vssm_forward.7} parent=1 // pred_check
      _
    $region3: #{vssm_forward.7} parent=1 // pred_check_branch
      %11 = sbr.rel (0) target = $region5
    $region4: #{vssm_forward.7} parent=1 // pred_region
      _
    $region5: #{vssm_forward.7} parent=1 // pred_fallthru
      _
    // Predicated region
    $region6: #{vssm_forward.7} parent=1 // pred_check
      _
    $region7: #{vssm_forward.7} parent=1 // pred_check_branch
      %13 = sbr.rel (0) target = $region9
    $region8: #{vssm_forward.7} parent=1 // pred_region
      _
    $region9: #{vssm_forward.7} parent=1 // pred_fallthru
      _
    // Predicated region
    $region10: #{vssm_forward.7} parent=1 // pred_check
      _
    $region11: #{vssm_forward.7} parent=1 // pred_check_branch
      %15 = sbr.rel (0) target = $region13
    $region12: #{vssm_forward.7} parent=1 // pred_region
      _
    $region13: #{vssm_forward.7} parent=1 // pred_fallthru
      _
    // Predicated region
    $region14: #{vssm_forward.7} parent=1 // pred_check
      _
    $region15: #{vssm_forward.7} parent=1 // pred_check_branch
      %17 = sbr.rel (0) target = $region17
    $region16: #{vssm_forward.7} parent=1 // pred_region
      _
    $region17: #{vssm_forward.7} parent=1 // pred_fallthru
      _
    %v18 = vld [vmem:[%s0] sm:$0xf]
    %v19 = vunpack.c.l.bf16 %v18
    %v21 = vcombine.high %v19, %v19
    %v23 = vunpack.c.l.s4 1983009808
    %v24 = vunpack.c.0.s8 %v23
    %v25 = vlaneseq
    %v26 = vshrl.u32 %v25, 7
    %v27 = vsub.s32 %v24, %v26
    %v28 = vrot.slane %v19, %v27
    %v30 = vunpack.c.l.s4 1983009808
    %v31 = vunpack.c.0.s8 %v30
    %v32 = vlaneseq
    %v33 = vshrl.u32 %v32, 7
    %v34 = vsub.s32 %v31, %v33
    %v35 = vrot.slane %v21, %v34
    %v36 = vcombine.high %v28, %v28
    %v37 = vcombine.high %v35, %v35
    %vm42 = vcmask 1041408
    %v43 = vsel %vm42, %v28, 0.0
    %v44 = vsel %vm42, %v36, 0.0
    %v45 = vadd.f32 %v43, %v44
    %v46 = vsel %vm42, %v35, 0.0
    %v47 = vadd.f32 %v45, %v46
    %v48 = vsel %vm42, %v37, 0.0
    %v49 = vadd.f32 %v47, %v48
    %50 = vadd.xlane.f32.xlu0 %v49
    %v51 = vpop.xlane.xlu0 %50
    %v52 = vrcp.pop 512.0
    %v53 = vmul.f32 %v51, %v52
    %v54 = vmul.f32 %v19, %v19
    %v56 = vcombine.high %v54, %v54
    %v58 = vunpack.c.l.s4 1983009808
    %v59 = vunpack.c.0.s8 %v58
    %v60 = vlaneseq
    %v61 = vshrl.u32 %v60, 7
    %v62 = vsub.s32 %v59, %v61
    %v63 = vrot.slane %v54, %v62
    %v65 = vunpack.c.l.s4 1983009808
    %v66 = vunpack.c.0.s8 %v65
    %v67 = vlaneseq
    %v68 = vshrl.u32 %v67, 7
    %v69 = vsub.s32 %v66, %v68
    %v70 = vrot.slane %v56, %v69
    %v71 = vcombine.high %v63, %v63
    %v72 = vcombine.high %v70, %v70
    %v77 = vsel %vm42, %v63, 0.0
    %v78 = vsel %vm42, %v71, 0.0
    %v79 = vadd.f32 %v77, %v78
    %v80 = vsel %vm42, %v70, 0.0
    %v81 = vadd.f32 %v79, %v80
    %v82 = vsel %vm42, %v72, 0.0
    %v83 = vadd.f32 %v81, %v82
    %84 = vadd.xlane.f32.xlu0 %v83
    %v85 = vpop.xlane.xlu0 %84
    %v86 = vmul.f32 %v85, %v52
    %v87 = vmul.f32 %v53, %v53
    %v88 = vsub.f32 %v86, %v87
    %v89 = vmax.f32 %v88, 0.0
    %v92 = vunpack.c.l.s4 269488144
    %v93 = vunpack.c.0.s8 %v92
    %v94 = vlaneseq
    %v95 = vshrl.u32 %v94, 7
    %v96 = vsub.s32 %v93, %v95
    %v97 = vrot.slane %v53, %v96
    %v99 = vsub.f32 %v19, %v97
    %v100 = vadd.f32 %v89, 1e-05
    %v101 = vrsqrt.pop %v100
    %v104 = vunpack.c.l.s4 269488144
    %v105 = vunpack.c.0.s8 %v104
    %v106 = vlaneseq
    %v107 = vshrl.u32 %v106, 7
    %v108 = vsub.s32 %v105, %v107
    %v109 = vrot.slane %v101, %v108
    %v111 = vmul.f32 %v99, %v109
    %v112 = vld [vmem:[%s1] sm:$0xf]
    %v114 = vlaneseq
    %v115 = vshrl.u32 %v114, 7
    %v116 = vsub.s32 0, %v115
    %v117 = vrot.slane %v112, %v116
    %v118 = vlaneseq
    %v119 = vshrl.u32 %v118, 7
    %v120 = vsub.s32 1, %v119
    %v121 = vrot.slane %v112, %v120
    %v122 = vlaneseq
    %v123 = vshrl.u32 %v122, 7
    %v124 = vsub.s32 2, %v123
    %v125 = vrot.slane %v112, %v124
    %v126 = vlaneseq
    %v127 = vshrl.u32 %v126, 7
    %v128 = vsub.s32 3, %v127
    %v129 = vrot.slane %v112, %v128
    %v130 = vcombine.low %v117, %v121
    %v131 = vcombine.low %v125, %v129
    %v133 = vunpack.c.l.s4 1983009808
    %v134 = vunpack.c.0.s8 %v133
    %v135 = vlaneseq
    %v136 = vshrl.u32 %v135, 7
    %v137 = vsub.s32 %v134, %v136
    %v138 = vrot.slane %v130, %v137
    %v140 = vunpack.c.l.s4 1983009808
    %v141 = vunpack.c.0.s8 %v140
    %v142 = vlaneseq
    %v143 = vshrl.u32 %v142, 7
    %v144 = vsub.s32 %v141, %v143
    %v145 = vrot.slane %v131, %v144
    %v146 = vcombine.low %v138, %v145
    %v148 = vmul.f32 %v111, %v146
    %v149 = vld [vmem:[%s2] sm:$0xf]
    %v151 = vlaneseq
    %v152 = vshrl.u32 %v151, 7
    %v153 = vsub.s32 0, %v152
    %v154 = vrot.slane %v149, %v153
    %v155 = vlaneseq
    %v156 = vshrl.u32 %v155, 7
    %v157 = vsub.s32 1, %v156
    %v158 = vrot.slane %v149, %v157
    %v159 = vlaneseq
    %v160 = vshrl.u32 %v159, 7
    %v161 = vsub.s32 2, %v160
    %v162 = vrot.slane %v149, %v161
    %v163 = vlaneseq
    %v164 = vshrl.u32 %v163, 7
    %v165 = vsub.s32 3, %v164
    %v166 = vrot.slane %v149, %v165
    %v167 = vcombine.low %v154, %v158
    %v168 = vcombine.low %v162, %v166
    %v170 = vunpack.c.l.s4 1983009808
    %v171 = vunpack.c.0.s8 %v170
    %v172 = vlaneseq
    %v173 = vshrl.u32 %v172, 7
    %v174 = vsub.s32 %v171, %v173
    %v175 = vrot.slane %v167, %v174
    %v177 = vunpack.c.l.s4 1983009808
    %v178 = vunpack.c.0.s8 %v177
    %v179 = vlaneseq
    %v180 = vshrl.u32 %v179, 7
    %v181 = vsub.s32 %v178, %v180
    %v182 = vrot.slane %v168, %v181
    %v183 = vcombine.low %v175, %v182
    %v185 = vadd.f32 %v148, %v183
    %v187 = vcombine.high %v185, %v185
    %v189 = vunpack.c.l.s4 1983009808
    %v190 = vunpack.c.0.s8 %v189
    %v191 = vlaneseq
    %v192 = vshrl.u32 %v191, 7
    %v193 = vsub.s32 %v190, %v192
    %v194 = vrot.slane %v185, %v193
    %v196 = vunpack.c.l.s4 1983009808
    %v197 = vunpack.c.0.s8 %v196
    %v198 = vlaneseq
    %v199 = vshrl.u32 %v198, 7
    %v200 = vsub.s32 %v197, %v199
    %v201 = vrot.slane %v187, %v200
    %v202 = vcombine.high %v194, %v194
    %v203 = vcombine.high %v201, %v201
    %v208 = vpack.c.bf16 %v194, %v194
    %v209 = vpack.c.bf16 %v202, %v202
    %v210 = vpack.c.bf16 %v201, %v201
    %v211 = vpack.c.bf16 %v203, %v203
    %v212 = vld [vmem:[%s3] sm:$0xff]
    %v213 = vld [vmem:[%s3 + $0x8] sm:$0xff]
    %v214 = vld [vmem:[%s3 + $0x10] sm:$0xff]
    %v215 = vld [vmem:[%s3 + $0x18] sm:$0xff]
    %v216 = vld [vmem:[%s3 + $0x20] sm:$0xff]
    %v217 = vld [vmem:[%s3 + $0x28] sm:$0xff]
    %v218 = vld [vmem:[%s3 + $0x30] sm:$0xff]
    %v219 = vld [vmem:[%s3 + $0x38] sm:$0xff]
    %v220 = vld [vmem:[%s3 + $0x40] sm:$0xff]
    %v221 = vld [vmem:[%s3 + $0x48] sm:$0xff]
    %v222 = vld [vmem:[%s3 + $0x50] sm:$0xff]
    %v223 = vld [vmem:[%s3 + $0x58] sm:$0xff]
    %v224 = vld [vmem:[%s3 + $0x60] sm:$0xff]
    %v225 = vld [vmem:[%s3 + $0x68] sm:$0xff]
    %v226 = vld [vmem:[%s3 + $0x70] sm:$0xff]
    %v227 = vld [vmem:[%s3 + $0x78] sm:$0xff]
    %v228 = vld [vmem:[%s3 + $0x80] sm:$0xff]
    %v229 = vld [vmem:[%s3 + $0x88] sm:$0xff]
    %v230 = vld [vmem:[%s3 + $0x90] sm:$0xff]
    %v231 = vld [vmem:[%s3 + $0x98] sm:$0xff]
    %v232 = vld [vmem:[%s3 + $0xa0] sm:$0xff]
    %v233 = vld [vmem:[%s3 + $0xa8] sm:$0xff]
    %v234 = vld [vmem:[%s3 + $0xb0] sm:$0xff]
    %v235 = vld [vmem:[%s3 + $0xb8] sm:$0xff]
    %v236 = vld [vmem:[%s3 + $0xc0] sm:$0xff]
    %v237 = vld [vmem:[%s3 + $0xc8] sm:$0xff]
    %v238 = vld [vmem:[%s3 + $0xd0] sm:$0xff]
    %v239 = vld [vmem:[%s3 + $0xd8] sm:$0xff]
    %v240 = vld [vmem:[%s3 + $0xe0] sm:$0xff]
    %v241 = vld [vmem:[%s3 + $0xe8] sm:$0xff]
    %v242 = vld [vmem:[%s3 + $0xf0] sm:$0xff]
    %v243 = vld [vmem:[%s3 + $0xf8] sm:$0xff]
    %v244 = vld [vmem:[%s3 + $0x100] sm:$0xff]
    %v245 = vld [vmem:[%s3 + $0x108] sm:$0xff]
    %v246 = vld [vmem:[%s3 + $0x110] sm:$0xff]
    %v247 = vld [vmem:[%s3 + $0x118] sm:$0xff]
    %v248 = vld [vmem:[%s3 + $0x120] sm:$0xff]
    %v249 = vld [vmem:[%s3 + $0x128] sm:$0xff]
    %v250 = vld [vmem:[%s3 + $0x130] sm:$0xff]
    %v251 = vld [vmem:[%s3 + $0x138] sm:$0xff]
    %v252 = vld [vmem:[%s3 + $0x140] sm:$0xff]
    %v253 = vld [vmem:[%s3 + $0x148] sm:$0xff]
    %v254 = vld [vmem:[%s3 + $0x150] sm:$0xff]
    %v255 = vld [vmem:[%s3 + $0x158] sm:$0xff]
    %v256 = vld [vmem:[%s3 + $0x160] sm:$0xff]
    %v257 = vld [vmem:[%s3 + $0x168] sm:$0xff]
    %v258 = vld [vmem:[%s3 + $0x170] sm:$0xff]
    %v259 = vld [vmem:[%s3 + $0x178] sm:$0xff]
    %v260 = vld [vmem:[%s3 + $0x180] sm:$0xff]
    %v261 = vld [vmem:[%s3 + $0x188] sm:$0xff]
    %v262 = vld [vmem:[%s3 + $0x190] sm:$0xff]
    %v263 = vld [vmem:[%s3 + $0x198] sm:$0xff]
    %v264 = vld [vmem:[%s3 + $0x1a0] sm:$0xff]
    %v265 = vld [vmem:[%s3 + $0x1a8] sm:$0xff]
    %v266 = vld [vmem:[%s3 + $0x1b0] sm:$0xff]
    %v267 = vld [vmem:[%s3 + $0x1b8] sm:$0xff]
    %v268 = vld [vmem:[%s3 + $0x1c0] sm:$0xff]
    %v269 = vld [vmem:[%s3 + $0x1c8] sm:$0xff]
    %v270 = vld [vmem:[%s3 + $0x1d0] sm:$0xff]
    %v271 = vld [vmem:[%s3 + $0x1d8] sm:$0xff]
    %v272 = vld [vmem:[%s3 + $0x1e0] sm:$0xff]
    %v273 = vld [vmem:[%s3 + $0x1e8] sm:$0xff]
    %v274 = vld [vmem:[%s3 + $0x1f0] sm:$0xff]
    %v275 = vld [vmem:[%s3 + $0x1f8] sm:$0xff]
    %v340 = vunpack.c.l.b16 %v212
    %v341 = vunpack.c.h.b16 %v212
    %v342 = vunpack.c.l.b16 %v213
    %v343 = vunpack.c.h.b16 %v213
    %v344 = vunpack.c.l.b16 %v214
    %v345 = vunpack.c.h.b16 %v214
    %v346 = vunpack.c.l.b16 %v215
    %v347 = vunpack.c.h.b16 %v215
    %v348 = vunpack.c.l.b16 %v216
    %v349 = vunpack.c.h.b16 %v216
    %v350 = vunpack.c.l.b16 %v217
    %v351 = vunpack.c.h.b16 %v217
    %v352 = vunpack.c.l.b16 %v218
    %v353 = vunpack.c.h.b16 %v218
    %v354 = vunpack.c.l.b16 %v219
    %v355 = vunpack.c.h.b16 %v219
    %v356 = vunpack.c.l.b16 %v220
    %v357 = vunpack.c.h.b16 %v220
    %v358 = vunpack.c.l.b16 %v221
    %v359 = vunpack.c.h.b16 %v221
    %v360 = vunpack.c.l.b16 %v222
    %v361 = vunpack.c.h.b16 %v222
    %v362 = vunpack.c.l.b16 %v223
    %v363 = vunpack.c.h.b16 %v223
    %v364 = vunpack.c.l.b16 %v224
    %v365 = vunpack.c.h.b16 %v224
    %v366 = vunpack.c.l.b16 %v225
    %v367 = vunpack.c.h.b16 %v225
    %v368 = vunpack.c.l.b16 %v226
    %v369 = vunpack.c.h.b16 %v226
    %v370 = vunpack.c.l.b16 %v227
    %v371 = vunpack.c.h.b16 %v227
    %v372 = vunpack.c.l.b16 %v228
    %v373 = vunpack.c.h.b16 %v228
    %v374 = vunpack.c.l.b16 %v229
    %v375 = vunpack.c.h.b16 %v229
    %v376 = vunpack.c.l.b16 %v230
    %v377 = vunpack.c.h.b16 %v230
    %v378 = vunpack.c.l.b16 %v231
    %v379 = vunpack.c.h.b16 %v231
    %v380 = vunpack.c.l.b16 %v232
    %v381 = vunpack.c.h.b16 %v232
    %v382 = vunpack.c.l.b16 %v233
    %v383 = vunpack.c.h.b16 %v233
    %v384 = vunpack.c.l.b16 %v234
    %v385 = vunpack.c.h.b16 %v234
    %v386 = vunpack.c.l.b16 %v235
    %v387 = vunpack.c.h.b16 %v235
    %v388 = vunpack.c.l.b16 %v236
    %v389 = vunpack.c.h.b16 %v236
    %v390 = vunpack.c.l.b16 %v237
    %v391 = vunpack.c.h.b16 %v237
    %v392 = vunpack.c.l.b16 %v238
    %v393 = vunpack.c.h.b16 %v238
    %v394 = vunpack.c.l.b16 %v239
    %v395 = vunpack.c.h.b16 %v239
    %v396 = vunpack.c.l.b16 %v240
    %v397 = vunpack.c.h.b16 %v240
    %v398 = vunpack.c.l.b16 %v241
    %v399 = vunpack.c.h.b16 %v241
    %v400 = vunpack.c.l.b16 %v242
    %v401 = vunpack.c.h.b16 %v242
    %v402 = vunpack.c.l.b16 %v243
    %v403 = vunpack.c.h.b16 %v243
    %v404 = vunpack.c.l.b16 %v244
    %v405 = vunpack.c.h.b16 %v244
    %v406 = vunpack.c.l.b16 %v245
    %v407 = vunpack.c.h.b16 %v245
    %v408 = vunpack.c.l.b16 %v246
    %v409 = vunpack.c.h.b16 %v246
    %v410 = vunpack.c.l.b16 %v247
    %v411 = vunpack.c.h.b16 %v247
    %v412 = vunpack.c.l.b16 %v248
    %v413 = vunpack.c.h.b16 %v248
    %v414 = vunpack.c.l.b16 %v249
    %v415 = vunpack.c.h.b16 %v249
    %v416 = vunpack.c.l.b16 %v250
    %v417 = vunpack.c.h.b16 %v250
    %v418 = vunpack.c.l.b16 %v251
    %v419 = vunpack.c.h.b16 %v251
    %v420 = vunpack.c.l.b16 %v252
    %v421 = vunpack.c.h.b16 %v252
    %v422 = vunpack.c.l.b16 %v253
    %v423 = vunpack.c.h.b16 %v253
    %v424 = vunpack.c.l.b16 %v254
    %v425 = vunpack.c.h.b16 %v254
    %v426 = vunpack.c.l.b16 %v255
    %v427 = vunpack.c.h.b16 %v255
    %v428 = vunpack.c.l.b16 %v256
    %v429 = vunpack.c.h.b16 %v256
    %v430 = vunpack.c.l.b16 %v257
    %v431 = vunpack.c.h.b16 %v257
    %v432 = vunpack.c.l.b16 %v258
    %v433 = vunpack.c.h.b16 %v258
    %v434 = vunpack.c.l.b16 %v259
    %v435 = vunpack.c.h.b16 %v259
    %v436 = vunpack.c.l.b16 %v260
    %v437 = vunpack.c.h.b16 %v260
    %v438 = vunpack.c.l.b16 %v261
    %v439 = vunpack.c.h.b16 %v261
    %v440 = vunpack.c.l.b16 %v262
    %v441 = vunpack.c.h.b16 %v262
    %v442 = vunpack.c.l.b16 %v263
    %v443 = vunpack.c.h.b16 %v263
    %v444 = vunpack.c.l.b16 %v264
    %v445 = vunpack.c.h.b16 %v264
    %v446 = vunpack.c.l.b16 %v265
    %v447 = vunpack.c.h.b16 %v265
    %v448 = vunpack.c.l.b16 %v266
    %v449 = vunpack.c.h.b16 %v266
    %v450 = vunpack.c.l.b16 %v267
    %v451 = vunpack.c.h.b16 %v267
    %v452 = vunpack.c.l.b16 %v268
    %v453 = vunpack.c.h.b16 %v268
    %v454 = vunpack.c.l.b16 %v269
    %v455 = vunpack.c.h.b16 %v269
    %v456 = vunpack.c.l.b16 %v270
    %v457 = vunpack.c.h.b16 %v270
    %v458 = vunpack.c.l.b16 %v271
    %v459 = vunpack.c.h.b16 %v271
    %v460 = vunpack.c.l.b16 %v272
    %v461 = vunpack.c.h.b16 %v272
    %v462 = vunpack.c.l.b16 %v273
    %v463 = vunpack.c.h.b16 %v273
    %v464 = vunpack.c.l.b16 %v274
    %v465 = vunpack.c.h.b16 %v274
    %v466 = vunpack.c.l.b16 %v275
    %v467 = vunpack.c.h.b16 %v275
    %v468 = vpack.c.b16 %v342, %v340
    %v469 = vpack.c.b16 %v343, %v341
    %v470 = vpack.c.b16 %v346, %v344
    %v471 = vpack.c.b16 %v347, %v345
    %v472 = vpack.c.b16 %v350, %v348
    %v473 = vpack.c.b16 %v351, %v349
    %v474 = vpack.c.b16 %v354, %v352
    %v475 = vpack.c.b16 %v355, %v353
    %v476 = vpack.c.b16 %v358, %v356
    %v477 = vpack.c.b16 %v359, %v357
    %v478 = vpack.c.b16 %v362, %v360
    %v479 = vpack.c.b16 %v363, %v361
    %v480 = vpack.c.b16 %v366, %v364
    %v481 = vpack.c.b16 %v367, %v365
    %v482 = vpack.c.b16 %v370, %v368
    %v483 = vpack.c.b16 %v371, %v369
    %v484 = vpack.c.b16 %v374, %v372
    %v485 = vpack.c.b16 %v375, %v373
    %v486 = vpack.c.b16 %v378, %v376
    %v487 = vpack.c.b16 %v379, %v377
    %v488 = vpack.c.b16 %v382, %v380
    %v489 = vpack.c.b16 %v383, %v381
    %v490 = vpack.c.b16 %v386, %v384
    %v491 = vpack.c.b16 %v387, %v385
    %v492 = vpack.c.b16 %v390, %v388
    %v493 = vpack.c.b16 %v391, %v389
    %v494 = vpack.c.b16 %v394, %v392
    %v495 = vpack.c.b16 %v395, %v393
    %v496 = vpack.c.b16 %v398, %v396
    %v497 = vpack.c.b16 %v399, %v397
    %v498 = vpack.c.b16 %v402, %v400
    %v499 = vpack.c.b16 %v403, %v401
    %v500 = vpack.c.b16 %v406, %v404
    %v501 = vpack.c.b16 %v407, %v405
    %v502 = vpack.c.b16 %v410, %v408
    %v503 = vpack.c.b16 %v411, %v409
    %v504 = vpack.c.b16 %v414, %v412
    %v505 = vpack.c.b16 %v415, %v413
    %v506 = vpack.c.b16 %v418, %v416
    %v507 = vpack.c.b16 %v419, %v417
    %v508 = vpack.c.b16 %v422, %v420
    %v509 = vpack.c.b16 %v423, %v421
    %v510 = vpack.c.b16 %v426, %v424
    %v511 = vpack.c.b16 %v427, %v425
    %v512 = vpack.c.b16 %v430, %v428
    %v513 = vpack.c.b16 %v431, %v429
    %v514 = vpack.c.b16 %v434, %v432
    %v515 = vpack.c.b16 %v435, %v433
    %v516 = vpack.c.b16 %v438, %v436
    %v517 = vpack.c.b16 %v439, %v437
    %v518 = vpack.c.b16 %v442, %v440
    %v519 = vpack.c.b16 %v443, %v441
    %v520 = vpack.c.b16 %v446, %v444
    %v521 = vpack.c.b16 %v447, %v445
    %v522 = vpack.c.b16 %v450, %v448
    %v523 = vpack.c.b16 %v451, %v449
    %v524 = vpack.c.b16 %v454, %v452
    %v525 = vpack.c.b16 %v455, %v453
    %v526 = vpack.c.b16 %v458, %v456
    %v527 = vpack.c.b16 %v459, %v457
    %v528 = vpack.c.b16 %v462, %v460
    %v529 = vpack.c.b16 %v463, %v461
    %v530 = vpack.c.b16 %v466, %v464
    %v531 = vpack.c.b16 %v467, %v465
    %596 = vmatprep.subr.bf16.mxu0 %v483
    %597 = vmatpush1.bf16.msra.mxu0 %v482
    %598 = vmatprep.subr.bf16.mxu0 %v481
    %599 = vmatpush1.bf16.msra.mxu0 %v480
    %600 = vmatprep.subr.bf16.mxu0 %v479
    %601 = vmatpush1.bf16.msra.mxu0 %v478
    %602 = vmatprep.subr.bf16.mxu0 %v477
    %603 = vmatpush1.bf16.msra.mxu0 %v476
    %604 = vmatprep.subr.bf16.mxu0 %v475
    %605 = vmatpush1.bf16.msra.mxu0 %v474
    %606 = vmatprep.subr.bf16.mxu0 %v473
    %607 = vmatpush1.bf16.msra.mxu0 %v472
    %608 = vmatprep.subr.bf16.mxu0 %v471
    %609 = vmatpush1.bf16.msra.mxu0 %v470
    %610 = vmatprep.subr.bf16.mxu0 %v469
    %611 = vmatpush1.bf16.msra.mxu0 %v468
    %612 = vmatprep.subr.bf16.mxu0 %v499
    %613 = vmatpush2.bf16.msra.mxu0 %v498
    %614 = vmatprep.subr.bf16.mxu0 %v497
    %615 = vmatpush2.bf16.msra.mxu0 %v496
    %616 = vmatprep.subr.bf16.mxu0 %v495
    %617 = vmatpush2.bf16.msra.mxu0 %v494
    %618 = vmatprep.subr.bf16.mxu0 %v493
    %619 = vmatpush2.bf16.msra.mxu0 %v492
    %620 = vmatprep.subr.bf16.mxu0 %v491
    %621 = vmatpush2.bf16.msra.mxu0 %v490
    %622 = vmatprep.subr.bf16.mxu0 %v489
    %623 = vmatpush2.bf16.msra.mxu0 %v488
    %624 = vmatprep.subr.bf16.mxu0 %v487
    %625 = vmatpush2.bf16.msra.mxu0 %v486
    %626 = vmatprep.subr.bf16.mxu0 %v485
    %627 = vmatpush2.bf16.msra.mxu0 %v484
    %628 = vmatprep.mubr.bf16.mxu0 %v209
    %629 = vmatmul.mubr.bf16.gmra.mxu0 %v208
    %v630 = vpop.f32.mrf.mxu0
    %v631 = vadd.f32 0.0, %v630
    %v632 = vpop.f32.mrf.mxu0
    %v633 = vadd.f32 0.0, %v632
    %v634 = vpop.f32.mrf.mxu0
    %v635 = vpop.f32.mrf.mxu0
    %636 = vdwg.mxu0
    %637 = vmatprep.subr.bf16.mxu0 %v515
    %638 = vmatpush1.bf16.msra.mxu0 %v514
    %639 = vmatprep.subr.bf16.mxu0 %v513
    %640 = vmatpush1.bf16.msra.mxu0 %v512
    %641 = vmatprep.subr.bf16.mxu0 %v511
    %642 = vmatpush1.bf16.msra.mxu0 %v510
    %643 = vmatprep.subr.bf16.mxu0 %v509
    %644 = vmatpush1.bf16.msra.mxu0 %v508
    %645 = vmatprep.subr.bf16.mxu0 %v507
    %646 = vmatpush1.bf16.msra.mxu0 %v506
    %647 = vmatprep.subr.bf16.mxu0 %v505
    %648 = vmatpush1.bf16.msra.mxu0 %v504
    %649 = vmatprep.subr.bf16.mxu0 %v503
    %650 = vmatpush1.bf16.msra.mxu0 %v502
    %651 = vmatprep.subr.bf16.mxu0 %v501
    %652 = vmatpush1.bf16.msra.mxu0 %v500
    %653 = vmatprep.subr.bf16.mxu0 %v531
    %654 = vmatpush2.bf16.msra.mxu0 %v530
    %655 = vmatprep.subr.bf16.mxu0 %v529
    %656 = vmatpush2.bf16.msra.mxu0 %v528
    %657 = vmatprep.subr.bf16.mxu0 %v527
    %658 = vmatpush2.bf16.msra.mxu0 %v526
    %659 = vmatprep.subr.bf16.mxu0 %v525
    %660 = vmatpush2.bf16.msra.mxu0 %v524
    %661 = vmatprep.subr.bf16.mxu0 %v523
    %662 = vmatpush2.bf16.msra.mxu0 %v522
    %663 = vmatprep.subr.bf16.mxu0 %v521
    %664 = vmatpush2.bf16.msra.mxu0 %v520
    %665 = vmatprep.subr.bf16.mxu0 %v519
    %666 = vmatpush2.bf16.msra.mxu0 %v518
    %667 = vmatprep.subr.bf16.mxu0 %v517
    %668 = vmatpush2.bf16.msra.mxu0 %v516
    %669 = vmatprep.mubr.bf16.mxu0 %v211
    %670 = vmatmul.mubr.bf16.gmra.mxu0 %v210
    %v671 = vpop.f32.mrf.mxu0
    %v672 = vadd.f32 %v631, %v671
    %v673 = vpop.f32.mrf.mxu0
    %v674 = vadd.f32 %v633, %v673
    %v675 = vpop.f32.mrf.mxu0
    %v676 = vpop.f32.mrf.mxu0
    %677 = vdwg.mxu0
    %v678 = vpack.c.bf16 %v672, %v672
    %v679 = vpack.c.bf16 %v674, %v674
    %v682 = vcombine.low %v678, %v679
    %v684 = vunpack.c.l.s4 1966171168
    %v685 = vunpack.c.0.s8 %v684
    %v686 = vlaneseq
    %v687 = vshrl.u32 %v686, 7
    %v688 = vsub.s32 %v685, %v687
    %v689 = vrot.slane %v682, %v688
    %v691 = vunpack.c.l.s4 1966171168
    %v692 = vunpack.c.0.s8 %v691
    %v693 = vlaneseq
    %v694 = vshrl.u32 %v693, 7
    %v695 = vsub.s32 %v692, %v694
    %v696 = vrot.slane %v689, %v695
    %698 = vst [vmem:[#allocation2] sm:$0x3] %v696
    // Predicated region
    $region18: #{vssm_forward.7} parent=1 // pred_check
      _
    $region19: #{vssm_forward.7} parent=1 // pred_check_branch
      %700 = sbr.rel (0) target = $region21
    $region20: #{vssm_forward.7} parent=1 // pred_region
      %s702 = ssub.s32 32, 32
      %703 = vsyncadd [#allocation3], %s702
      %s705 = sshll.u32 [#allocation2], 4
      %s706 = int_to_ptr.vmem [resolvable:$true] %s705
      %708 = dma.vmem_to_hbm [thread:$0]  %s706, 32, %s4, [#allocation3]
    $region21: #{vssm_forward.7} parent=1 // pred_fallthru
      _
    // Predicated region
    $region22: #{vssm_forward.7} parent=1 // pred_check
      _
    $region23: #{vssm_forward.7} parent=1 // pred_check_branch
      %710 = sbr.rel (0) target = $region25
    $region24: #{vssm_forward.7} parent=1 // pred_region
      %711 = dma.done [#allocation3], 32
    $region25: #{vssm_forward.7} parent=1 // pred_fallthru
      _
    %712 = vsyncpa [#allocation3], 1

</llo_original>
